<compile_context>
chip_gen: v5e
topology: v5e:2x2
jax: 0.10.0
libtpu: 0.0.40
codegen_flags: <defaults>
</compile_context>

<pallas_src>
import math

import jax
import jax.numpy as jnp
from jax import lax
from jax.experimental import pallas as pl
from jax.experimental.pallas import tpu as pltpu

# ---------------------------------------------------------------------------
# Small synthetic DistilBERT config
# (real model: vocab=30522, dim=768, 12 heads, ffn=3072, 6 layers)
VOCAB = 100
MAX_POS = 16
DIM = 32                      # hidden size
N_HEADS = 4
D_HEAD = DIM // N_HEADS
FFN = 64                      # feed-forward intermediate size
N_LAYERS = 2
LN_EPS = 1e-12                # DistilBERT LayerNorm eps
ATTN_SCALE = 1.0 / math.sqrt(D_HEAD)

BATCH = 2
SEQ = 8


# ---------------------------------------------------------------------------
# In-kernel helpers (f32 math, bf16 MXU operands)
def _erf_approx(x):
    # Abramowitz & Stegun 7.1.26 polynomial erf (|err| < 1.5e-7).
    a1, a2, a3, a4, a5 = 0.254829592, -0.284496736, 1.421413741, -1.453152027, 1.061405429
    p = 0.3275911
    ax = jnp.abs(x)
    t = 1.0 / (1.0 + p * ax)
    poly = ((((a5 * t + a4) * t + a3) * t + a2) * t + a1) * t
    y = 1.0 - poly * jnp.exp(-ax * ax)
    return jnp.where(x >= 0.0, y, -y)


def _gelu_exact(x):
    # DistilBERT uses exact (erf-based) GELU.
    return 0.5 * x * (1.0 + _erf_approx(x * (1.0 / math.sqrt(2.0))))


def _layernorm(h, g, b):
    mean = jnp.mean(h, axis=-1, keepdims=True)
    var = jnp.mean((h - mean) ** 2, axis=-1, keepdims=True)
    return (h - mean) * lax.rsqrt(var + LN_EPS) * g + b


def _bf16_dot(x_f32, w_bf16, b_f32):
    # bf16 x bf16 MXU matmul with f32 accumulation + f32 bias epilogue.
    y = jnp.dot(x_f32.astype(jnp.bfloat16), w_bf16,
                preferred_element_type=jnp.float32)
    return y + b_f32


# ---------------------------------------------------------------------------
# Fused whole-model kernel.
# Grid: (BATCH, N_LAYERS). One batch element's full sequence per step; the layer
# axis is innermost and "arbitrary"; h_ref (the output block) is resident in VMEM
# across it and carries the hidden state from layer to layer.
def _distilbert_kernel(we_ref, pe_ref, eg_ref, eb_ref,
                       wqkv_ref, bqkv_ref, wo_ref, bo_ref,
                       ln1_g_ref, ln1_b_ref,
                       wff1_ref, bff1_ref, wff2_ref, bff2_ref,
                       ln2_g_ref, ln2_b_ref, h_ref):
    layer = pl.program_id(1)

    # ---- embeddings + LayerNorm (only on the first layer step) ----
    @pl.when(layer == 0)
    def _():
        h_ref[...] = _layernorm(we_ref[...] + pe_ref[...], eg_ref[...], eb_ref[...])
        # dropout is a no-op in eval mode.

    h = h_ref[...]                                        # (S, DIM) f32, resident

    # ---- fused Q/K/V projection (single lane-dense 3*DIM matmul) ----
    qkv = _bf16_dot(h, wqkv_ref[...], bqkv_ref[...])      # (S, 3*DIM) f32

    # ---- multi-head self-attention with per-head Wo accumulation (no concat) ----
    wo = wo_ref[...]                                      # (DIM, DIM) bf16
    attn = jnp.zeros((SEQ, DIM), jnp.float32)
    for hd in range(N_HEADS):                             # tiny static unroll (toy size)
        lo = hd * D_HEAD
        q = (qkv[:, lo:lo + D_HEAD] * ATTN_SCALE).astype(jnp.bfloat16)   # (S, dh)
        k = qkv[:, DIM + lo:DIM + lo + D_HEAD].astype(jnp.bfloat16)      # (S, dh)
        v = qkv[:, 2 * DIM + lo:2 * DIM + lo + D_HEAD].astype(jnp.bfloat16)
        # q @ k^T without an explicit transpose: contract on d_head of both.
        s = lax.dot_general(q, k, (((1,), (1,)), ((), ())),
                            preferred_element_type=jnp.float32)          # (S, S) f32
        m = jnp.max(s, axis=-1, keepdims=True)
        e = jnp.exp(s - m)
        inv = pl.reciprocal(jnp.sum(e, axis=-1, keepdims=True), approx=True)
        p = (e * inv).astype(jnp.bfloat16)
        ctx = jnp.dot(p, v, preferred_element_type=jnp.float32)          # (S, dh) f32
        attn = attn + jnp.dot(ctx.astype(jnp.bfloat16), wo[lo:lo + D_HEAD, :],
                              preferred_element_type=jnp.float32)
    attn = attn + bo_ref[...]

    # ---- residual + LayerNorm ----
    h1 = _layernorm(attn + h, ln1_g_ref[...], ln1_b_ref[...])

    # ---- feed-forward: FFN1 + GELU + FFN2 + residual + LayerNorm ----
    ff = _gelu_exact(_bf16_dot(h1, wff1_ref[...], bff1_ref[...]))
    ff = _bf16_dot(ff, wff2_ref[...], bff2_ref[...])
    h_ref[...] = _layernorm(ff + h1, ln2_g_ref[...], ln2_b_ref[...])


# ---------------------------------------------------------------------------
# Pallas wrapper: single pallas_call for the whole forward pass.
def pallas_distilbert(params, we_rows, batch, seq_len):
    row_spec = pl.BlockSpec((seq_len, DIM), lambda b, l: (b, 0))

    def const2(shape):
        return pl.BlockSpec(shape, lambda b, l: (0, 0))

    def lyr(shape):
        # stacked per-layer param: leading layer dim squeezed, selected by index_map
        return pl.BlockSpec((None,) + shape, lambda b, l: (l, 0, 0))

    return pl.pallas_call(
        _distilbert_kernel,
        out_shape=jax.ShapeDtypeStruct((batch * seq_len, DIM), jnp.float32),
        grid=(batch, N_LAYERS),
        in_specs=[
            row_spec,                                 # gathered word embeddings
            const2((seq_len, DIM)),                   # positional embeddings
            const2((1, DIM)), const2((1, DIM)),       # embedding LN gamma / beta
            lyr((DIM, 3 * DIM)), lyr((1, 3 * DIM)),   # fused QKV weight (bf16) / bias
            lyr((DIM, DIM)), lyr((1, DIM)),           # attn output weight / bias
            lyr((1, DIM)), lyr((1, DIM)),             # sa LN gamma / beta
            lyr((DIM, FFN)), lyr((1, FFN)),           # FFN1 weight / bias
            lyr((FFN, DIM)), lyr((1, DIM)),           # FFN2 weight / bias
            lyr((1, DIM)), lyr((1, DIM)),             # ffn LN gamma / beta
        ],
        out_specs=row_spec,
        compiler_params=pltpu.CompilerParams(
            dimension_semantics=("parallel", "arbitrary"),
            vmem_limit_bytes=32 * 1024 * 1024,
        ),
    )(we_rows, params["pos_emb"][:seq_len], params["emb_ln_g"], params["emb_ln_b"],
      params["qkv_w"], params["qkv_b"], params["o_w"], params["o_b"],
      params["sa_ln_g"], params["sa_ln_b"],
      params["ff1_w"], params["ff1_b"], params["ff2_w"], params["ff2_b"],
      params["ff_ln_g"], params["ff_ln_b"])


# ---------------------------------------------------------------------------
# DistilBERT forward (returns last_hidden_state)
def distilbert_forward(params, input_ids):
    B, S = input_ids.shape
    # Embedding gather is data-dependent plain-JAX glue kept outside the kernel.
    we = params["word_emb"][input_ids].reshape(B * S, DIM)
    h = pallas_distilbert(params, we, B, S)
    return h.reshape(B, S, DIM)


# ---------------------------------------------------------------------------
# Pure-JAX reference (same bf16-operand / f32-accumulate matmul policy)
def _ref_ln(x, g, b):
    mean = jnp.mean(x, axis=-1, keepdims=True)
    var = jnp.mean((x - mean) ** 2, axis=-1, keepdims=True)
    return (x - mean) * lax.rsqrt(var + LN_EPS) * g + b


def _ref_dot(x, w_bf16, b):
    return jnp.dot(x.astype(jnp.bfloat16), w_bf16,
                   preferred_element_type=jnp.float32) + b


def reference_forward(params, input_ids):
    B, S = input_ids.shape
    h = params["word_emb"][input_ids] + params["pos_emb"][:S][None, :, :]
    h = _ref_ln(h, params["emb_ln_g"], params["emb_ln_b"])

    def split(x):  # (B,S,DIM) -> (B,H,S,dh)
        return x.reshape(B, S, N_HEADS, D_HEAD).transpose(0, 2, 1, 3)

    for l in range(N_LAYERS):
        qkv = _ref_dot(h, params["qkv_w"][l], params["qkv_b"][l])
        q, k, v = qkv[..., :DIM], qkv[..., DIM:2 * DIM], qkv[..., 2 * DIM:]
        qh = (split(q) * ATTN_SCALE).astype(jnp.bfloat16)
        kh = split(k).astype(jnp.bfloat16)
        vh = split(v).astype(jnp.bfloat16)
        s = jnp.einsum("bhqd,bhkd->bhqk", qh, kh,
                       preferred_element_type=jnp.float32)
        p = jax.nn.softmax(s, axis=-1)
        ctx = jnp.einsum("bhqk,bhkd->bhqd", p.astype(jnp.bfloat16), vh,
                         preferred_element_type=jnp.float32)
        ctx = ctx.transpose(0, 2, 1, 3).reshape(B, S, DIM)
        attn_out = _ref_dot(ctx, params["o_w"][l], params["o_b"][l])
        h = _ref_ln(attn_out + h, params["sa_ln_g"][l], params["sa_ln_b"][l])
        ff = jax.nn.gelu(_ref_dot(h, params["ff1_w"][l], params["ff1_b"][l]),
                         approximate=False)
        ff = _ref_dot(ff, params["ff2_w"][l], params["ff2_b"][l])
        h = _ref_ln(ff + h, params["ff_ln_g"][l], params["ff_ln_b"][l])
    return h


# ---------------------------------------------------------------------------
# Deterministic synthetic parameters.
# Matmul weights bf16, everything else f32.  Per-layer params stacked along a
# leading (N_LAYERS, ...) axis so a single kernel can index them per grid step.
def init_params(key):
    def dense(k, fan_in, fan_out):
        kw, kb = jax.random.split(k)
        w = 0.02 * jax.random.normal(kw, (fan_in, fan_out), jnp.float32)
        b = 0.01 * jax.random.normal(kb, (1, fan_out), jnp.float32)
        return w.astype(jnp.bfloat16), b

    keys = jax.random.split(key, 2 + N_LAYERS)
    params = {
        "word_emb": 0.02 * jax.random.normal(keys[0], (VOCAB, DIM), jnp.float32),
        "pos_emb": 0.02 * jax.random.normal(keys[1], (MAX_POS, DIM), jnp.float32),
        "emb_ln_g": jnp.ones((1, DIM), jnp.float32),
        "emb_ln_b": jnp.zeros((1, DIM), jnp.float32),
    }
    names = ["qkv_w", "qkv_b", "o_w", "o_b", "sa_ln_g", "sa_ln_b",
             "ff1_w", "ff1_b", "ff2_w", "ff2_b", "ff_ln_g", "ff_ln_b"]
    per = {n: [] for n in names}
    for l in range(N_LAYERS):
        lk = jax.random.split(keys[2 + l], 6)
        q_w, q_b = dense(lk[0], DIM, DIM)
        k_w, k_b = dense(lk[1], DIM, DIM)
        v_w, v_b = dense(lk[2], DIM, DIM)
        o_w, o_b = dense(lk[3], DIM, DIM)
        f1_w, f1_b = dense(lk[4], DIM, FFN)
        f2_w, f2_b = dense(lk[5], FFN, DIM)
        per["qkv_w"].append(jnp.concatenate([q_w, k_w, v_w], axis=1))   # (DIM, 3*DIM) bf16
        per["qkv_b"].append(jnp.concatenate([q_b, k_b, v_b], axis=1))   # (1, 3*DIM) f32
        per["o_w"].append(o_w)
        per["o_b"].append(o_b)
        per["sa_ln_g"].append(jnp.ones((1, DIM), jnp.float32))
        per["sa_ln_b"].append(jnp.zeros((1, DIM), jnp.float32))
        per["ff1_w"].append(f1_w)
        per["ff1_b"].append(f1_b)
        per["ff2_w"].append(f2_w)
        per["ff2_b"].append(f2_b)
        per["ff_ln_g"].append(jnp.ones((1, DIM), jnp.float32))
        per["ff_ln_b"].append(jnp.zeros((1, DIM), jnp.float32))
    for n in names:
        params[n] = jnp.stack(per[n], axis=0)
    return params


# ---------------------------------------------------------------------------
if __name__ == "__main__":
    root = jax.random.PRNGKey(0)
    k_ids, k_params = jax.random.split(root)

    input_ids = jax.random.randint(k_ids, (BATCH, SEQ), 0, VOCAB, dtype=jnp.int32)
    params = init_params(k_params)

    forward = jax.jit(distilbert_forward)
    out = jax.block_until_ready(forward(params, input_ids))   # (B, S, DIM)

    ref = reference_forward(params, input_ids)
    assert out.shape == (BATCH, SEQ, DIM)
    assert jnp.allclose(out, ref, atol=2e-3, rtol=2e-3), "mismatch vs JAX reference"

    print("KERNEL_OK")
</pallas_src>

<mosaic_0001>
module attributes {stable_mosaic.version = 11 : i64} {
  func.func @_distilbert_kernel(%arg0: i32, %arg1: i32, %arg2: memref<8x32xf32, #tpu.memory_space<vmem>>, %arg3: memref<8x32xf32, #tpu.memory_space<vmem>>, %arg4: memref<1x32xf32, #tpu.memory_space<vmem>>, %arg5: memref<1x32xf32, #tpu.memory_space<vmem>>, %arg6: memref<1x32x96xbf16, #tpu.memory_space<vmem>>, %arg7: memref<1x1x96xf32, #tpu.memory_space<vmem>>, %arg8: memref<1x32x32xbf16, #tpu.memory_space<vmem>>, %arg9: memref<1x1x32xf32, #tpu.memory_space<vmem>>, %arg10: memref<1x1x32xf32, #tpu.memory_space<vmem>>, %arg11: memref<1x1x32xf32, #tpu.memory_space<vmem>>, %arg12: memref<1x32x64xbf16, #tpu.memory_space<vmem>>, %arg13: memref<1x1x64xf32, #tpu.memory_space<vmem>>, %arg14: memref<1x64x32xbf16, #tpu.memory_space<vmem>>, %arg15: memref<1x1x32xf32, #tpu.memory_space<vmem>>, %arg16: memref<1x1x32xf32, #tpu.memory_space<vmem>>, %arg17: memref<1x1x32xf32, #tpu.memory_space<vmem>>, %arg18: memref<8x32xf32, #tpu.memory_space<vmem>>) attributes {dimension_semantics = [#tpu.dimension_semantics<parallel>, #tpu.dimension_semantics<arbitrary>], iteration_bounds = array<i64: 2, 2>, scalar_prefetch = 0 : i64, scratch_operands = 0 : i64, tpu.core_type = #tpu.core_type<tc>, window_params = [{transform_indices = @transform_0, window_bounds = array<i64: 8, 32>}, {pipeline_mode = #tpu.pipeline_mode<synchronous>, transform_indices = @transform_1, window_bounds = array<i64: 8, 32>}, {pipeline_mode = #tpu.pipeline_mode<synchronous>, transform_indices = @transform_2, window_bounds = array<i64: 1, 32>}, {pipeline_mode = #tpu.pipeline_mode<synchronous>, transform_indices = @transform_3, window_bounds = array<i64: 1, 32>}, {transform_indices = @transform_4, window_bounds = array<i64: 1, 32, 96>}, {transform_indices = @transform_5, window_bounds = array<i64: 1, 1, 96>}, {transform_indices = @transform_6, window_bounds = array<i64: 1, 32, 32>}, {transform_indices = @transform_7, window_bounds = array<i64: 1, 1, 32>}, {transform_indices = @transform_8, window_bounds = array<i64: 1, 1, 32>}, {transform_indices = @transform_9, window_bounds = array<i64: 1, 1, 32>}, {transform_indices = @transform_10, window_bounds = array<i64: 1, 32, 64>}, {transform_indices = @transform_11, window_bounds = array<i64: 1, 1, 64>}, {transform_indices = @transform_12, window_bounds = array<i64: 1, 64, 32>}, {transform_indices = @transform_13, window_bounds = array<i64: 1, 1, 32>}, {transform_indices = @transform_14, window_bounds = array<i64: 1, 1, 32>}, {transform_indices = @transform_15, window_bounds = array<i64: 1, 1, 32>}, {transform_indices = @transform_16, window_bounds = array<i64: 8, 32>}]} {
    %c0_i32 = arith.constant 0 : i32
    %0 = arith.cmpi eq, %arg1, %c0_i32 : i32
    %1 = arith.extui %0 : i1 to i32
    %c0_i32_0 = arith.constant 0 : i32
    %2 = arith.cmpi ne, %1, %c0_i32_0 : i32
    scf.if %2 {
      %c0_92 = arith.constant 0 : index
      %c0_93 = arith.constant 0 : index
      %230 = vector.load %arg2[%c0_92, %c0_93] : memref<8x32xf32, #tpu.memory_space<vmem>>, vector<8x32xf32>
      %c0_94 = arith.constant 0 : index
      %c0_95 = arith.constant 0 : index
      %231 = vector.load %arg3[%c0_94, %c0_95] : memref<8x32xf32, #tpu.memory_space<vmem>>, vector<8x32xf32>
      %232 = arith.addf %230, %231 : vector<8x32xf32>
      %c0_96 = arith.constant 0 : index
      %c0_97 = arith.constant 0 : index
      %233 = vector.load %arg4[%c0_96, %c0_97] : memref<1x32xf32, #tpu.memory_space<vmem>>, vector<1x32xf32>
      %c0_98 = arith.constant 0 : index
      %c0_99 = arith.constant 0 : index
      %234 = vector.load %arg5[%c0_98, %c0_99] : memref<1x32xf32, #tpu.memory_space<vmem>>, vector<1x32xf32>
      %cst_100 = arith.constant dense<0.000000e+00> : vector<8xf32>
      %235 = vector.multi_reduction <add>, %232, %cst_100 [1] : vector<8x32xf32> to vector<8xf32>
      %236 = vector.shape_cast %235 : vector<8xf32> to vector<8x1xf32>
      %cst_101 = arith.constant 3.200000e+01 : f32
      %237 = vector.broadcast %cst_101 : f32 to vector<8x1xf32>
      %238 = arith.divf %236, %237 : vector<8x1xf32>
      %239 = vector.broadcast %238 : vector<8x1xf32> to vector<8x32xf32>
      %240 = arith.subf %232, %239 : vector<8x32xf32>
      %241 = arith.mulf %240, %240 : vector<8x32xf32>
      %cst_102 = arith.constant dense<0.000000e+00> : vector<8xf32>
      %242 = vector.multi_reduction <add>, %241, %cst_102 [1] : vector<8x32xf32> to vector<8xf32>
      %243 = vector.shape_cast %242 : vector<8xf32> to vector<8x1xf32>
      %cst_103 = arith.constant 3.200000e+01 : f32
      %244 = vector.broadcast %cst_103 : f32 to vector<8x1xf32>
      %245 = arith.divf %243, %244 : vector<8x1xf32>
      %246 = vector.broadcast %238 : vector<8x1xf32> to vector<8x32xf32>
      %247 = arith.subf %232, %246 : vector<8x32xf32>
      %cst_104 = arith.constant 9.99999996E-13 : f32
      %248 = vector.broadcast %cst_104 : f32 to vector<8x1xf32>
      %249 = arith.addf %245, %248 : vector<8x1xf32>
      %250 = math.rsqrt %249 : vector<8x1xf32>
      %251 = vector.broadcast %250 : vector<8x1xf32> to vector<8x32xf32>
      %252 = arith.mulf %247, %251 : vector<8x32xf32>
      %253 = vector.broadcast %233 : vector<1x32xf32> to vector<8x32xf32>
      %254 = arith.mulf %252, %253 : vector<8x32xf32>
      %255 = vector.broadcast %234 : vector<1x32xf32> to vector<8x32xf32>
      %256 = arith.addf %254, %255 : vector<8x32xf32>
      %c0_105 = arith.constant 0 : index
      %c0_106 = arith.constant 0 : index
      %257 = vector.load %arg18[%c0_105, %c0_106] : memref<8x32xf32, #tpu.memory_space<vmem>>, vector<8x32xf32>
      tpu.vector_store %arg18[%c0_105, %c0_106], %256 {strides = array<i32>} : memref<8x32xf32, #tpu.memory_space<vmem>>, vector<8x32xf32>,
    } else {
    }
    %c0 = arith.constant 0 : index
    %c0_1 = arith.constant 0 : index
    %3 = vector.load %arg18[%c0, %c0_1] : memref<8x32xf32, #tpu.memory_space<vmem>>, vector<8x32xf32>
    %c0_2 = arith.constant 0 : index
    %c0_3 = arith.constant 0 : index
    %c0_4 = arith.constant 0 : index
    %4 = vector.load %arg6[%c0_2, %c0_3, %c0_4] : memref<1x32x96xbf16, #tpu.memory_space<vmem>>, vector<1x32x96xbf16>
    %5 = vector.shape_cast %4 : vector<1x32x96xbf16> to vector<32x96xbf16>
    %c0_5 = arith.constant 0 : index
    %c0_6 = arith.constant 0 : index
    %c0_7 = arith.constant 0 : index
    %6 = vector.load %arg7[%c0_5, %c0_6, %c0_7] : memref<1x1x96xf32, #tpu.memory_space<vmem>>, vector<1x1x96xf32>
    %7 = vector.shape_cast %6 : vector<1x1x96xf32> to vector<1x96xf32>
    %8 = arith.truncf %3 : vector<8x32xf32> to vector<8x32xbf16>
    %cst = arith.constant dense<0.000000e+00> : vector<8x96xf32>
    %9 = tpu.matmul %8, %5, %cst {dimension_numbers = #tpu.dot_dimension_numbers<[1], [0], [0], [1], [0, 0, 1, 1], [], []>} : vector<8x32xbf16>, vector<32x96xbf16>, vector<8x96xf32> -> vector<8x96xf32>
    %10 = vector.broadcast %7 : vector<1x96xf32> to vector<8x96xf32>
    %11 = arith.addf %9, %10 : vector<8x96xf32>
    %c0_8 = arith.constant 0 : index
    %c0_9 = arith.constant 0 : index
    %c0_10 = arith.constant 0 : index
    %12 = vector.load %arg8[%c0_8, %c0_9, %c0_10] : memref<1x32x32xbf16, #tpu.memory_space<vmem>>, vector<1x32x32xbf16>
    %13 = vector.shape_cast %12 : vector<1x32x32xbf16> to vector<32x32xbf16>
    %cst_11 = arith.constant 0.000000e+00 : f32
    %14 = vector.broadcast %cst_11 : f32 to vector<8x32xf32>
    %15 = vector.extract_strided_slice %11 {offsets = [0, 0], sizes = [8, 8], strides = [1, 1]} : vector<8x96xf32> to vector<8x8xf32>
    %cst_12 = arith.constant 0.353553385 : f32
    %16 = vector.broadcast %cst_12 : f32 to vector<8x8xf32>
    %17 = arith.mulf %15, %16 : vector<8x8xf32>
    %18 = arith.truncf %17 : vector<8x8xf32> to vector<8x8xbf16>
    %19 = vector.extract_strided_slice %11 {offsets = [0, 32], sizes = [8, 8], strides = [1, 1]} : vector<8x96xf32> to vector<8x8xf32>
    %20 = arith.truncf %19 : vector<8x8xf32> to vector<8x8xbf16>
    %21 = vector.extract_strided_slice %11 {offsets = [0, 64], sizes = [8, 8], strides = [1, 1]} : vector<8x96xf32> to vector<8x8xf32>
    %22 = arith.truncf %21 : vector<8x8xf32> to vector<8x8xbf16>
    %cst_13 = arith.constant dense<0.000000e+00> : vector<8x8xf32>
    %23 = tpu.matmul %18, %20, %cst_13 {dimension_numbers = #tpu.dot_dimension_numbers<[1], [1], [0], [0], [0, 0, 1, 0], [], []>} : vector<8x8xbf16>, vector<8x8xbf16>, vector<8x8xf32> -> vector<8x8xf32>
    %cst_14 = arith.constant dense<0xFF800000> : vector<8xf32>
    %24 = vector.multi_reduction <maximumf>, %23, %cst_14 [1] : vector<8x8xf32> to vector<8xf32>
    %25 = vector.shape_cast %24 : vector<8xf32> to vector<8x1xf32>
    %26 = vector.broadcast %25 : vector<8x1xf32> to vector<8x8xf32>
    %27 = arith.subf %23, %26 : vector<8x8xf32>
    %28 = math.exp %27 : vector<8x8xf32>
    %cst_15 = arith.constant dense<0.000000e+00> : vector<8xf32>
    %29 = vector.multi_reduction <add>, %28, %cst_15 [1] : vector<8x8xf32> to vector<8xf32>
    %30 = vector.shape_cast %29 : vector<8xf32> to vector<8x1xf32>
    %31 = tpu.reciprocal %30 {approx = true} : vector<8x1xf32> -> vector<8x1xf32>
    %32 = vector.broadcast %31 : vector<8x1xf32> to vector<8x8xf32>
    %33 = arith.mulf %28, %32 : vector<8x8xf32>
    %34 = arith.truncf %33 : vector<8x8xf32> to vector<8x8xbf16>
    %cst_16 = arith.constant dense<0.000000e+00> : vector<8x8xf32>
    %35 = tpu.matmul %34, %22, %cst_16 {dimension_numbers = #tpu.dot_dimension_numbers<[1], [0], [0], [1], [0, 0, 1, 1], [], []>} : vector<8x8xbf16>, vector<8x8xbf16>, vector<8x8xf32> -> vector<8x8xf32>
    %36 = arith.truncf %35 : vector<8x8xf32> to vector<8x8xbf16>
    %37 = vector.extract_strided_slice %13 {offsets = [0, 0], sizes = [8, 32], strides = [1, 1]} : vector<32x32xbf16> to vector<8x32xbf16>
    %cst_17 = arith.constant dense<0.000000e+00> : vector<8x32xf32>
    %38 = tpu.matmul %36, %37, %cst_17 {dimension_numbers = #tpu.dot_dimension_numbers<[1], [0], [0], [1], [0, 0, 1, 1], [], []>} : vector<8x8xbf16>, vector<8x32xbf16>, vector<8x32xf32> -> vector<8x32xf32>
    %39 = arith.addf %14, %38 : vector<8x32xf32>
    %40 = vector.extract_strided_slice %11 {offsets = [0, 8], sizes = [8, 8], strides = [1, 1]} : vector<8x96xf32> to vector<8x8xf32>
    %cst_18 = arith.constant 0.353553385 : f32
    %41 = vector.broadcast %cst_18 : f32 to vector<8x8xf32>
    %42 = arith.mulf %40, %41 : vector<8x8xf32>
    %43 = arith.truncf %42 : vector<8x8xf32> to vector<8x8xbf16>
    %44 = vector.extract_strided_slice %11 {offsets = [0, 40], sizes = [8, 8], strides = [1, 1]} : vector<8x96xf32> to vector<8x8xf32>
    %45 = arith.truncf %44 : vector<8x8xf32> to vector<8x8xbf16>
    %46 = vector.extract_strided_slice %11 {offsets = [0, 72], sizes = [8, 8], strides = [1, 1]} : vector<8x96xf32> to vector<8x8xf32>
    %47 = arith.truncf %46 : vector<8x8xf32> to vector<8x8xbf16>
    %cst_19 = arith.constant dense<0.000000e+00> : vector<8x8xf32>
    %48 = tpu.matmul %43, %45, %cst_19 {dimension_numbers = #tpu.dot_dimension_numbers<[1], [1], [0], [0], [0, 0, 1, 0], [], []>} : vector<8x8xbf16>, vector<8x8xbf16>, vector<8x8xf32> -> vector<8x8xf32>
    %cst_20 = arith.constant dense<0xFF800000> : vector<8xf32>
    %49 = vector.multi_reduction <maximumf>, %48, %cst_20 [1] : vector<8x8xf32> to vector<8xf32>
    %50 = vector.shape_cast %49 : vector<8xf32> to vector<8x1xf32>
    %51 = vector.broadcast %50 : vector<8x1xf32> to vector<8x8xf32>
    %52 = arith.subf %48, %51 : vector<8x8xf32>
    %53 = math.exp %52 : vector<8x8xf32>
    %cst_21 = arith.constant dense<0.000000e+00> : vector<8xf32>
    %54 = vector.multi_reduction <add>, %53, %cst_21 [1] : vector<8x8xf32> to vector<8xf32>
    %55 = vector.shape_cast %54 : vector<8xf32> to vector<8x1xf32>
    %56 = tpu.reciprocal %55 {approx = true} : vector<8x1xf32> -> vector<8x1xf32>
    %57 = vector.broadcast %56 : vector<8x1xf32> to vector<8x8xf32>
    %58 = arith.mulf %53, %57 : vector<8x8xf32>
    %59 = arith.truncf %58 : vector<8x8xf32> to vector<8x8xbf16>
    %cst_22 = arith.constant dense<0.000000e+00> : vector<8x8xf32>
    %60 = tpu.matmul %59, %47, %cst_22 {dimension_numbers = #tpu.dot_dimension_numbers<[1], [0], [0], [1], [0, 0, 1, 1], [], []>} : vector<8x8xbf16>, vector<8x8xbf16>, vector<8x8xf32> -> vector<8x8xf32>
    %61 = arith.truncf %60 : vector<8x8xf32> to vector<8x8xbf16>
    %62 = vector.extract_strided_slice %13 {offsets = [8, 0], sizes = [8, 32], strides = [1, 1]} : vector<32x32xbf16> to vector<8x32xbf16>
    %cst_23 = arith.constant dense<0.000000e+00> : vector<8x32xf32>
    %63 = tpu.matmul %61, %62, %cst_23 {dimension_numbers = #tpu.dot_dimension_numbers<[1], [0], [0], [1], [0, 0, 1, 1], [], []>} : vector<8x8xbf16>, vector<8x32xbf16>, vector<8x32xf32> -> vector<8x32xf32>
    %64 = arith.addf %39, %63 : vector<8x32xf32>
    %65 = vector.extract_strided_slice %11 {offsets = [0, 16], sizes = [8, 8], strides = [1, 1]} : vector<8x96xf32> to vector<8x8xf32>
    %cst_24 = arith.constant 0.353553385 : f32
    %66 = vector.broadcast %cst_24 : f32 to vector<8x8xf32>
    %67 = arith.mulf %65, %66 : vector<8x8xf32>
    %68 = arith.truncf %67 : vector<8x8xf32> to vector<8x8xbf16>
    %69 = vector.extract_strided_slice %11 {offsets = [0, 48], sizes = [8, 8], strides = [1, 1]} : vector<8x96xf32> to vector<8x8xf32>
    %70 = arith.truncf %69 : vector<8x8xf32> to vector<8x8xbf16>
    %71 = vector.extract_strided_slice %11 {offsets = [0, 80], sizes = [8, 8], strides = [1, 1]} : vector<8x96xf32> to vector<8x8xf32>
    %72 = arith.truncf %71 : vector<8x8xf32> to vector<8x8xbf16>
    %cst_25 = arith.constant dense<0.000000e+00> : vector<8x8xf32>
    %73 = tpu.matmul %68, %70, %cst_25 {dimension_numbers = #tpu.dot_dimension_numbers<[1], [1], [0], [0], [0, 0, 1, 0], [], []>} : vector<8x8xbf16>, vector<8x8xbf16>, vector<8x8xf32> -> vector<8x8xf32>
    %cst_26 = arith.constant dense<0xFF800000> : vector<8xf32>
    %74 = vector.multi_reduction <maximumf>, %73, %cst_26 [1] : vector<8x8xf32> to vector<8xf32>
    %75 = vector.shape_cast %74 : vector<8xf32> to vector<8x1xf32>
    %76 = vector.broadcast %75 : vector<8x1xf32> to vector<8x8xf32>
    %77 = arith.subf %73, %76 : vector<8x8xf32>
    %78 = math.exp %77 : vector<8x8xf32>
    %cst_27 = arith.constant dense<0.000000e+00> : vector<8xf32>
    %79 = vector.multi_reduction <add>, %78, %cst_27 [1] : vector<8x8xf32> to vector<8xf32>
    %80 = vector.shape_cast %79 : vector<8xf32> to vector<8x1xf32>
    %81 = tpu.reciprocal %80 {approx = true} : vector<8x1xf32> -> vector<8x1xf32>
    %82 = vector.broadcast %81 : vector<8x1xf32> to vector<8x8xf32>
    %83 = arith.mulf %78, %82 : vector<8x8xf32>
    %84 = arith.truncf %83 : vector<8x8xf32> to vector<8x8xbf16>
    %cst_28 = arith.constant dense<0.000000e+00> : vector<8x8xf32>
    %85 = tpu.matmul %84, %72, %cst_28 {dimension_numbers = #tpu.dot_dimension_numbers<[1], [0], [0], [1], [0, 0, 1, 1], [], []>} : vector<8x8xbf16>, vector<8x8xbf16>, vector<8x8xf32> -> vector<8x8xf32>
    %86 = arith.truncf %85 : vector<8x8xf32> to vector<8x8xbf16>
    %87 = vector.extract_strided_slice %13 {offsets = [16, 0], sizes = [8, 32], strides = [1, 1]} : vector<32x32xbf16> to vector<8x32xbf16>
    %cst_29 = arith.constant dense<0.000000e+00> : vector<8x32xf32>
    %88 = tpu.matmul %86, %87, %cst_29 {dimension_numbers = #tpu.dot_dimension_numbers<[1], [0], [0], [1], [0, 0, 1, 1], [], []>} : vector<8x8xbf16>, vector<8x32xbf16>, vector<8x32xf32> -> vector<8x32xf32>
    %89 = arith.addf %64, %88 : vector<8x32xf32>
    %90 = vector.extract_strided_slice %11 {offsets = [0, 24], sizes = [8, 8], strides = [1, 1]} : vector<8x96xf32> to vector<8x8xf32>
    %cst_30 = arith.constant 0.353553385 : f32
    %91 = vector.broadcast %cst_30 : f32 to vector<8x8xf32>
    %92 = arith.mulf %90, %91 : vector<8x8xf32>
    %93 = arith.truncf %92 : vector<8x8xf32> to vector<8x8xbf16>
    %94 = vector.extract_strided_slice %11 {offsets = [0, 56], sizes = [8, 8], strides = [1, 1]} : vector<8x96xf32> to vector<8x8xf32>
    %95 = arith.truncf %94 : vector<8x8xf32> to vector<8x8xbf16>
    %96 = vector.extract_strided_slice %11 {offsets = [0, 88], sizes = [8, 8], strides = [1, 1]} : vector<8x96xf32> to vector<8x8xf32>
    %97 = arith.truncf %96 : vector<8x8xf32> to vector<8x8xbf16>
    %cst_31 = arith.constant dense<0.000000e+00> : vector<8x8xf32>
    %98 = tpu.matmul %93, %95, %cst_31 {dimension_numbers = #tpu.dot_dimension_numbers<[1], [1], [0], [0], [0, 0, 1, 0], [], []>} : vector<8x8xbf16>, vector<8x8xbf16>, vector<8x8xf32> -> vector<8x8xf32>
    %cst_32 = arith.constant dense<0xFF800000> : vector<8xf32>
    %99 = vector.multi_reduction <maximumf>, %98, %cst_32 [1] : vector<8x8xf32> to vector<8xf32>
    %100 = vector.shape_cast %99 : vector<8xf32> to vector<8x1xf32>
    %101 = vector.broadcast %100 : vector<8x1xf32> to vector<8x8xf32>
    %102 = arith.subf %98, %101 : vector<8x8xf32>
    %103 = math.exp %102 : vector<8x8xf32>
    %cst_33 = arith.constant dense<0.000000e+00> : vector<8xf32>
    %104 = vector.multi_reduction <add>, %103, %cst_33 [1] : vector<8x8xf32> to vector<8xf32>
    %105 = vector.shape_cast %104 : vector<8xf32> to vector<8x1xf32>
    %106 = tpu.reciprocal %105 {approx = true} : vector<8x1xf32> -> vector<8x1xf32>
    %107 = vector.broadcast %106 : vector<8x1xf32> to vector<8x8xf32>
    %108 = arith.mulf %103, %107 : vector<8x8xf32>
    %109 = arith.truncf %108 : vector<8x8xf32> to vector<8x8xbf16>
    %cst_34 = arith.constant dense<0.000000e+00> : vector<8x8xf32>
    %110 = tpu.matmul %109, %97, %cst_34 {dimension_numbers = #tpu.dot_dimension_numbers<[1], [0], [0], [1], [0, 0, 1, 1], [], []>} : vector<8x8xbf16>, vector<8x8xbf16>, vector<8x8xf32> -> vector<8x8xf32>
    %111 = arith.truncf %110 : vector<8x8xf32> to vector<8x8xbf16>
    %112 = vector.extract_strided_slice %13 {offsets = [24, 0], sizes = [8, 32], strides = [1, 1]} : vector<32x32xbf16> to vector<8x32xbf16>
    %cst_35 = arith.constant dense<0.000000e+00> : vector<8x32xf32>
    %113 = tpu.matmul %111, %112, %cst_35 {dimension_numbers = #tpu.dot_dimension_numbers<[1], [0], [0], [1], [0, 0, 1, 1], [], []>} : vector<8x8xbf16>, vector<8x32xbf16>, vector<8x32xf32> -> vector<8x32xf32>
    %114 = arith.addf %89, %113 : vector<8x32xf32>
    %c0_36 = arith.constant 0 : index
    %c0_37 = arith.constant 0 : index
    %c0_38 = arith.constant 0 : index
    %115 = vector.load %arg9[%c0_36, %c0_37, %c0_38] : memref<1x1x32xf32, #tpu.memory_space<vmem>>, vector<1x1x32xf32>
    %116 = vector.shape_cast %115 : vector<1x1x32xf32> to vector<1x32xf32>
    %117 = vector.broadcast %116 : vector<1x32xf32> to vector<8x32xf32>
    %118 = arith.addf %114, %117 : vector<8x32xf32>
    %119 = arith.addf %118, %3 : vector<8x32xf32>
    %c0_39 = arith.constant 0 : index
    %c0_40 = arith.constant 0 : index
    %c0_41 = arith.constant 0 : index
    %120 = vector.load %arg10[%c0_39, %c0_40, %c0_41] : memref<1x1x32xf32, #tpu.memory_space<vmem>>, vector<1x1x32xf32>
    %121 = vector.shape_cast %120 : vector<1x1x32xf32> to vector<1x32xf32>
    %c0_42 = arith.constant 0 : index
    %c0_43 = arith.constant 0 : index
    %c0_44 = arith.constant 0 : index
    %122 = vector.load %arg11[%c0_42, %c0_43, %c0_44] : memref<1x1x32xf32, #tpu.memory_space<vmem>>, vector<1x1x32xf32>
    %123 = vector.shape_cast %122 : vector<1x1x32xf32> to vector<1x32xf32>
    %cst_45 = arith.constant dense<0.000000e+00> : vector<8xf32>
    %124 = vector.multi_reduction <add>, %119, %cst_45 [1] : vector<8x32xf32> to vector<8xf32>
    %125 = vector.shape_cast %124 : vector<8xf32> to vector<8x1xf32>
    %cst_46 = arith.constant 3.200000e+01 : f32
    %126 = vector.broadcast %cst_46 : f32 to vector<8x1xf32>
    %127 = arith.divf %125, %126 : vector<8x1xf32>
    %128 = vector.broadcast %127 : vector<8x1xf32> to vector<8x32xf32>
    %129 = arith.subf %119, %128 : vector<8x32xf32>
    %130 = arith.mulf %129, %129 : vector<8x32xf32>
    %cst_47 = arith.constant dense<0.000000e+00> : vector<8xf32>
    %131 = vector.multi_reduction <add>, %130, %cst_47 [1] : vector<8x32xf32> to vector<8xf32>
    %132 = vector.shape_cast %131 : vector<8xf32> to vector<8x1xf32>
    %cst_48 = arith.constant 3.200000e+01 : f32
    %133 = vector.broadcast %cst_48 : f32 to vector<8x1xf32>
    %134 = arith.divf %132, %133 : vector<8x1xf32>
    %135 = vector.broadcast %127 : vector<8x1xf32> to vector<8x32xf32>
    %136 = arith.subf %119, %135 : vector<8x32xf32>
    %cst_49 = arith.constant 9.99999996E-13 : f32
    %137 = vector.broadcast %cst_49 : f32 to vector<8x1xf32>
    %138 = arith.addf %134, %137 : vector<8x1xf32>
    %139 = math.rsqrt %138 : vector<8x1xf32>
    %140 = vector.broadcast %139 : vector<8x1xf32> to vector<8x32xf32>
    %141 = arith.mulf %136, %140 : vector<8x32xf32>
    %142 = vector.broadcast %121 : vector<1x32xf32> to vector<8x32xf32>
    %143 = arith.mulf %141, %142 : vector<8x32xf32>
    %144 = vector.broadcast %123 : vector<1x32xf32> to vector<8x32xf32>
    %145 = arith.addf %143, %144 : vector<8x32xf32>
    %c0_50 = arith.constant 0 : index
    %c0_51 = arith.constant 0 : index
    %c0_52 = arith.constant 0 : index
    %146 = vector.load %arg12[%c0_50, %c0_51, %c0_52] : memref<1x32x64xbf16, #tpu.memory_space<vmem>>, vector<1x32x64xbf16>
    %147 = vector.shape_cast %146 : vector<1x32x64xbf16> to vector<32x64xbf16>
    %c0_53 = arith.constant 0 : index
    %c0_54 = arith.constant 0 : index
    %c0_55 = arith.constant 0 : index
    %148 = vector.load %arg13[%c0_53, %c0_54, %c0_55] : memref<1x1x64xf32, #tpu.memory_space<vmem>>, vector<1x1x64xf32>
    %149 = vector.shape_cast %148 : vector<1x1x64xf32> to vector<1x64xf32>
    %150 = arith.truncf %145 : vector<8x32xf32> to vector<8x32xbf16>
    %cst_56 = arith.constant dense<0.000000e+00> : vector<8x64xf32>
    %151 = tpu.matmul %150, %147, %cst_56 {dimension_numbers = #tpu.dot_dimension_numbers<[1], [0], [0], [1], [0, 0, 1, 1], [], []>} : vector<8x32xbf16>, vector<32x64xbf16>, vector<8x64xf32> -> vector<8x64xf32>
    %152 = vector.broadcast %149 : vector<1x64xf32> to vector<8x64xf32>
    %153 = arith.addf %151, %152 : vector<8x64xf32>
    %cst_57 = arith.constant 5.000000e-01 : f32
    %154 = vector.broadcast %cst_57 : f32 to vector<8x64xf32>
    %155 = arith.mulf %154, %153 : vector<8x64xf32>
    %cst_58 = arith.constant 0.707106769 : f32
    %156 = vector.broadcast %cst_58 : f32 to vector<8x64xf32>
    %157 = arith.mulf %153, %156 : vector<8x64xf32>
    %158 = math.absf %157 : vector<8x64xf32>
    %cst_59 = arith.constant 0.327591091 : f32
    %159 = vector.broadcast %cst_59 : f32 to vector<8x64xf32>
    %160 = arith.mulf %159, %158 : vector<8x64xf32>
    %cst_60 = arith.constant 1.000000e+00 : f32
    %161 = vector.broadcast %cst_60 : f32 to vector<8x64xf32>
    %162 = arith.addf %161, %160 : vector<8x64xf32>
    %cst_61 = arith.constant 1.000000e+00 : f32
    %163 = vector.broadcast %cst_61 : f32 to vector<8x64xf32>
    %164 = arith.divf %163, %162 : vector<8x64xf32>
    %cst_62 = arith.constant 1.06140542 : f32
    %165 = vector.broadcast %cst_62 : f32 to vector<8x64xf32>
    %166 = arith.mulf %165, %164 : vector<8x64xf32>
    %cst_63 = arith.constant -1.45315206 : f32
    %167 = vector.broadcast %cst_63 : f32 to vector<8x64xf32>
    %168 = arith.addf %166, %167 : vector<8x64xf32>
    %169 = arith.mulf %168, %164 : vector<8x64xf32>
    %cst_64 = arith.constant 1.42141378 : f32
    %170 = vector.broadcast %cst_64 : f32 to vector<8x64xf32>
    %171 = arith.addf %169, %170 : vector<8x64xf32>
    %172 = arith.mulf %171, %164 : vector<8x64xf32>
    %cst_65 = arith.constant -0.284496725 : f32
    %173 = vector.broadcast %cst_65 : f32 to vector<8x64xf32>
    %174 = arith.addf %172, %173 : vector<8x64xf32>
    %175 = arith.mulf %174, %164 : vector<8x64xf32>
    %cst_66 = arith.constant 0.254829586 : f32
    %176 = vector.broadcast %cst_66 : f32 to vector<8x64xf32>
    %177 = arith.addf %175, %176 : vector<8x64xf32>
    %178 = arith.mulf %177, %164 : vector<8x64xf32>
    %cst_67 = arith.constant 0.000000e+00 : f32
    %179 = vector.broadcast %cst_67 : f32 to vector<8x64xf32>
    %180 = arith.subf %179, %158 : vector<8x64xf32>
    %181 = arith.mulf %180, %158 : vector<8x64xf32>
    %182 = math.exp %181 : vector<8x64xf32>
    %183 = arith.mulf %178, %182 : vector<8x64xf32>
    %cst_68 = arith.constant 1.000000e+00 : f32
    %184 = vector.broadcast %cst_68 : f32 to vector<8x64xf32>
    %185 = arith.subf %184, %183 : vector<8x64xf32>
    %cst_69 = arith.constant 0.000000e+00 : f32
    %186 = vector.broadcast %cst_69 : f32 to vector<8x64xf32>
    %187 = arith.cmpf oge, %157, %186 : vector<8x64xf32>
    %cst_70 = arith.constant 0.000000e+00 : f32
    %188 = vector.broadcast %cst_70 : f32 to vector<8x64xf32>
    %189 = arith.subf %188, %185 : vector<8x64xf32>
    %190 = arith.select %187, %185, %189 : vector<8x64xi1>, vector<8x64xf32>
    %cst_71 = arith.constant 1.000000e+00 : f32
    %191 = vector.broadcast %cst_71 : f32 to vector<8x64xf32>
    %192 = arith.addf %191, %190 : vector<8x64xf32>
    %193 = arith.mulf %155, %192 : vector<8x64xf32>
    %c0_72 = arith.constant 0 : index
    %c0_73 = arith.constant 0 : index
    %c0_74 = arith.constant 0 : index
    %194 = vector.load %arg14[%c0_72, %c0_73, %c0_74] : memref<1x64x32xbf16, #tpu.memory_space<vmem>>, vector<1x64x32xbf16>
    %195 = vector.shape_cast %194 : vector<1x64x32xbf16> to vector<64x32xbf16>
    %c0_75 = arith.constant 0 : index
    %c0_76 = arith.constant 0 : index
    %c0_77 = arith.constant 0 : index
    %196 = vector.load %arg15[%c0_75, %c0_76, %c0_77] : memref<1x1x32xf32, #tpu.memory_space<vmem>>, vector<1x1x32xf32>
    %197 = vector.shape_cast %196 : vector<1x1x32xf32> to vector<1x32xf32>
    %198 = arith.truncf %193 : vector<8x64xf32> to vector<8x64xbf16>
    %cst_78 = arith.constant dense<0.000000e+00> : vector<8x32xf32>
    %199 = tpu.matmul %198, %195, %cst_78 {dimension_numbers = #tpu.dot_dimension_numbers<[1], [0], [0], [1], [0, 0, 1, 1], [], []>} : vector<8x64xbf16>, vector<64x32xbf16>, vector<8x32xf32> -> vector<8x32xf32>
    %200 = vector.broadcast %197 : vector<1x32xf32> to vector<8x32xf32>
    %201 = arith.addf %199, %200 : vector<8x32xf32>
    %202 = arith.addf %201, %145 : vector<8x32xf32>
    %c0_79 = arith.constant 0 : index
    %c0_80 = arith.constant 0 : index
    %c0_81 = arith.constant 0 : index
    %203 = vector.load %arg16[%c0_79, %c0_80, %c0_81] : memref<1x1x32xf32, #tpu.memory_space<vmem>>, vector<1x1x32xf32>
    %204 = vector.shape_cast %203 : vector<1x1x32xf32> to vector<1x32xf32>
    %c0_82 = arith.constant 0 : index
    %c0_83 = arith.constant 0 : index
    %c0_84 = arith.constant 0 : index
    %205 = vector.load %arg17[%c0_82, %c0_83, %c0_84] : memref<1x1x32xf32, #tpu.memory_space<vmem>>, vector<1x1x32xf32>
    %206 = vector.shape_cast %205 : vector<1x1x32xf32> to vector<1x32xf32>
    %cst_85 = arith.constant dense<0.000000e+00> : vector<8xf32>
    %207 = vector.multi_reduction <add>, %202, %cst_85 [1] : vector<8x32xf32> to vector<8xf32>
    %208 = vector.shape_cast %207 : vector<8xf32> to vector<8x1xf32>
    %cst_86 = arith.constant 3.200000e+01 : f32
    %209 = vector.broadcast %cst_86 : f32 to vector<8x1xf32>
    %210 = arith.divf %208, %209 : vector<8x1xf32>
    %211 = vector.broadcast %210 : vector<8x1xf32> to vector<8x32xf32>
    %212 = arith.subf %202, %211 : vector<8x32xf32>
    %213 = arith.mulf %212, %212 : vector<8x32xf32>
    %cst_87 = arith.constant dense<0.000000e+00> : vector<8xf32>
    %214 = vector.multi_reduction <add>, %213, %cst_87 [1] : vector<8x32xf32> to vector<8xf32>
    %215 = vector.shape_cast %214 : vector<8xf32> to vector<8x1xf32>
    %cst_88 = arith.constant 3.200000e+01 : f32
    %216 = vector.broadcast %cst_88 : f32 to vector<8x1xf32>
    %217 = arith.divf %215, %216 : vector<8x1xf32>
    %218 = vector.broadcast %210 : vector<8x1xf32> to vector<8x32xf32>
    %219 = arith.subf %202, %218 : vector<8x32xf32>
    %cst_89 = arith.constant 9.99999996E-13 : f32
    %220 = vector.broadcast %cst_89 : f32 to vector<8x1xf32>
    %221 = arith.addf %217, %220 : vector<8x1xf32>
    %222 = math.rsqrt %221 : vector<8x1xf32>
    %223 = vector.broadcast %222 : vector<8x1xf32> to vector<8x32xf32>
    %224 = arith.mulf %219, %223 : vector<8x32xf32>
    %225 = vector.broadcast %204 : vector<1x32xf32> to vector<8x32xf32>
    %226 = arith.mulf %224, %225 : vector<8x32xf32>
    %227 = vector.broadcast %206 : vector<1x32xf32> to vector<8x32xf32>
    %228 = arith.addf %226, %227 : vector<8x32xf32>
    %c0_90 = arith.constant 0 : index
    %c0_91 = arith.constant 0 : index
    %229 = vector.load %arg18[%c0_90, %c0_91] : memref<8x32xf32, #tpu.memory_space<vmem>>, vector<8x32xf32>
    tpu.vector_store %arg18[%c0_90, %c0_91], %228 {strides = array<i32>} : memref<8x32xf32, #tpu.memory_space<vmem>>, vector<8x32xf32>,
    return
  }
  func.func @transform_0(%arg0: i32, %arg1: i32) -> (i32, i32) {
    %c0_i32 = arith.constant 0 : i32
    %c0_i32_0 = arith.constant 0 : i32
    return %arg0, %c0_i32 : i32, i32
  }
  func.func @transform_1(%arg0: i32, %arg1: i32) -> (i32, i32) {
    %c0_i32 = arith.constant 0 : i32
    %c0_i32_0 = arith.constant 0 : i32
    %c0_i32_1 = arith.constant 0 : i32
    return %c0_i32, %c0_i32_0 : i32, i32
  }
  func.func @transform_2(%arg0: i32, %arg1: i32) -> (i32, i32) {
    %c0_i32 = arith.constant 0 : i32
    %c0_i32_0 = arith.constant 0 : i32
    %c0_i32_1 = arith.constant 0 : i32
    return %c0_i32, %c0_i32_0 : i32, i32
  }
  func.func @transform_3(%arg0: i32, %arg1: i32) -> (i32, i32) {
    %c0_i32 = arith.constant 0 : i32
    %c0_i32_0 = arith.constant 0 : i32
    %c0_i32_1 = arith.constant 0 : i32
    return %c0_i32, %c0_i32_0 : i32, i32
  }
  func.func @transform_4(%arg0: i32, %arg1: i32) -> (i32, i32, i32) {
    %c0_i32 = arith.constant 0 : i32
    %c0_i32_0 = arith.constant 0 : i32
    %c0_i32_1 = arith.constant 0 : i32
    return %arg1, %c0_i32, %c0_i32_0 : i32, i32, i32
  }
  func.func @transform_5(%arg0: i32, %arg1: i32) -> (i32, i32, i32) {
    %c0_i32 = arith.constant 0 : i32
    %c0_i32_0 = arith.constant 0 : i32
    %c0_i32_1 = arith.constant 0 : i32
    return %arg1, %c0_i32, %c0_i32_0 : i32, i32, i32
  }
  func.func @transform_6(%arg0: i32, %arg1: i32) -> (i32, i32, i32) {
    %c0_i32 = arith.constant 0 : i32
    %c0_i32_0 = arith.constant 0 : i32
    %c0_i32_1 = arith.constant 0 : i32
    return %arg1, %c0_i32, %c0_i32_0 : i32, i32, i32
  }
  func.func @transform_7(%arg0: i32, %arg1: i32) -> (i32, i32, i32) {
    %c0_i32 = arith.constant 0 : i32
    %c0_i32_0 = arith.constant 0 : i32
    %c0_i32_1 = arith.constant 0 : i32
    return %arg1, %c0_i32, %c0_i32_0 : i32, i32, i32
  }
  func.func @transform_8(%arg0: i32, %arg1: i32) -> (i32, i32, i32) {
    %c0_i32 = arith.constant 0 : i32
    %c0_i32_0 = arith.constant 0 : i32
    %c0_i32_1 = arith.constant 0 : i32
    return %arg1, %c0_i32, %c0_i32_0 : i32, i32, i32
  }
  func.func @transform_9(%arg0: i32, %arg1: i32) -> (i32, i32, i32) {
    %c0_i32 = arith.constant 0 : i32
    %c0_i32_0 = arith.constant 0 : i32
    %c0_i32_1 = arith.constant 0 : i32
    return %arg1, %c0_i32, %c0_i32_0 : i32, i32, i32
  }
  func.func @transform_10(%arg0: i32, %arg1: i32) -> (i32, i32, i32) {
    %c0_i32 = arith.constant 0 : i32
    %c0_i32_0 = arith.constant 0 : i32
    %c0_i32_1 = arith.constant 0 : i32
    return %arg1, %c0_i32, %c0_i32_0 : i32, i32, i32
  }
  func.func @transform_11(%arg0: i32, %arg1: i32) -> (i32, i32, i32) {
    %c0_i32 = arith.constant 0 : i32
    %c0_i32_0 = arith.constant 0 : i32
    %c0_i32_1 = arith.constant 0 : i32
    return %arg1, %c0_i32, %c0_i32_0 : i32, i32, i32
  }
  func.func @transform_12(%arg0: i32, %arg1: i32) -> (i32, i32, i32) {
    %c0_i32 = arith.constant 0 : i32
    %c0_i32_0 = arith.constant 0 : i32
    %c0_i32_1 = arith.constant 0 : i32
    return %arg1, %c0_i32, %c0_i32_0 : i32, i32, i32
  }
  func.func @transform_13(%arg0: i32, %arg1: i32) -> (i32, i32, i32) {
    %c0_i32 = arith.constant 0 : i32
    %c0_i32_0 = arith.constant 0 : i32
    %c0_i32_1 = arith.constant 0 : i32
    return %arg1, %c0_i32, %c0_i32_0 : i32, i32, i32
  }
  func.func @transform_14(%arg0: i32, %arg1: i32) -> (i32, i32, i32) {
    %c0_i32 = arith.constant 0 : i32
    %c0_i32_0 = arith.constant 0 : i32
    %c0_i32_1 = arith.constant 0 : i32
    return %arg1, %c0_i32, %c0_i32_0 : i32, i32, i32
  }
  func.func @transform_15(%arg0: i32, %arg1: i32) -> (i32, i32, i32) {
    %c0_i32 = arith.constant 0 : i32
    %c0_i32_0 = arith.constant 0 : i32
    %c0_i32_1 = arith.constant 0 : i32
    return %arg1, %c0_i32, %c0_i32_0 : i32, i32, i32
  }
  func.func @transform_16(%arg0: i32, %arg1: i32) -> (i32, i32) {
    %c0_i32 = arith.constant 0 : i32
    %c0_i32_0 = arith.constant 0 : i32
    return %arg0, %c0_i32 : i32, i32
  }
}

</mosaic_0001>

<llo_original>
// kernel: distilbert_forward.1
$region0: #{distilbert_forward.1}
  #allocation0 [shape = 'u32[]', space=smem, size = 0x4, offset = 0x4, fixed_abs, tag = 'smem constant byte address 0x4 - core index']
  #allocation1 [shape = 'u32[72,128]{1,0:T(1,128)}', space=vmem, size = 0x9000, scoped, tag = 'internal scratch']
  %s0 = inlined_call_operand.vmem [shape: f32[16,32], index: 0, kind: input, shape index: {}]
  %s1 = inlined_call_operand.vmem [shape: f32[8,32], index: 1, kind: input, shape index: {}]
  %s2 = inlined_call_operand.vmem [shape: f32[1,32], index: 2, kind: input, shape index: {}]
  %s3 = inlined_call_operand.vmem [shape: f32[1,32], index: 3, kind: input, shape index: {}]
  %s4 = inlined_call_operand.vmem [shape: bf16[2,32,96], index: 4, kind: input, shape index: {}]
  %s5 = inlined_call_operand.vmem [shape: f32[2,1,96], index: 5, kind: input, shape index: {}]
  %s6 = inlined_call_operand.vmem [shape: bf16[2,32,32], index: 6, kind: input, shape index: {}]
  %s7 = inlined_call_operand.vmem [shape: f32[2,1,32], index: 7, kind: input, shape index: {}]
  %s8 = inlined_call_operand.vmem [shape: f32[2,1,32], index: 8, kind: input, shape index: {}]
  %s9 = inlined_call_operand.vmem [shape: f32[2,1,32], index: 9, kind: input, shape index: {}]
  %s10 = inlined_call_operand.vmem [shape: bf16[2,32,64], index: 10, kind: input, shape index: {}]
  %s11 = inlined_call_operand.vmem [shape: f32[2,1,64], index: 11, kind: input, shape index: {}]
  %s12 = inlined_call_operand.vmem [shape: bf16[2,64,32], index: 12, kind: input, shape index: {}]
  %s13 = inlined_call_operand.vmem [shape: f32[2,1,32], index: 13, kind: input, shape index: {}]
  %s14 = inlined_call_operand.vmem [shape: f32[2,1,32], index: 14, kind: input, shape index: {}]
  %s15 = inlined_call_operand.vmem [shape: f32[2,1,32], index: 15, kind: input, shape index: {}]
  %s16 = inlined_call_operand.hbm [shape: f32[16,32], index: 16, kind: output, shape index: {}]
  %s17 = sld [smem:[#allocation0]]
  $region101: #{distilbert_forward.1} parent=0
    _
  %s19 = ssub.s32 1, %s17
  %s20 = scalar_select 0, %s19, %s17
  $region1: #{distilbert_forward.1} parent=0
    #allocation2 [shape = 'u8[8192]{0}', space=vmem, size = 0x2000, scoped, tag = 'output window, operand 0']
    #allocation3 [shape = 's32[2]{0}', space=sflag, size = 0x8, scoped, tag = 'scoped memory for distilbert_forward.1']
    %21 = vsyncpa [#allocation3], 0
    %s22 = scalar_lea.sflag [#allocation3], 1
    %23 = vsyncpa %s22, 0
    loop: start=0, step=1, limit=6
    $region2: #{distilbert_forward.1} parent=1 // loop_pre_header
      _
    $region3: #{distilbert_forward.1} parent=1 // loop_header
      %s25 = sphi 0, %s29
      %p26 = scmp.ge.s32.totalorder %s25, 6
      %s32 = sphi 0, %s44
      %s33 = sphi 0, %s40
      %s34 = sphi 0, %s32
      %s35 = sphi 0, %s33
      %s36 = sphi 0, %s34
      %s37 = sphi 0, %s35
      %s47 = sphi 0, %s49
      %s50 = sphi 0, %s47
      %s51 = sphi 0, %s50
      %s67 = sphi 0, %s51
      %s71 = sphi 0, %s71
      %s73 = sphi 0, %s71
      %s74 = sphi 0, %s73
      %s88 = sphi 0, %s74
      %s92 = sphi 0, %s92
      %s94 = sphi 0, %s92
      %s95 = sphi 0, %s94
      %s109 = sphi 0, %s95
      %s113 = sphi 0, %s113
      %s115 = sphi 0, %s113
      %s116 = sphi 0, %s115
      %s130 = sphi 0, %s116
      %s136 = sphi 0, %s138
      %s139 = sphi 0, %s136
      %s140 = sphi 0, %s139
      %s156 = sphi 0, %s140
      %s162 = sphi 0, %s164
      %s165 = sphi 0, %s162
      %s166 = sphi 0, %s165
      %s182 = sphi 0, %s166
      %s188 = sphi 0, %s190
      %s191 = sphi 0, %s188
      %s192 = sphi 0, %s191
      %s208 = sphi 0, %s192
      %s214 = sphi 0, %s216
      %s217 = sphi 0, %s214
      %s218 = sphi 0, %s217
      %s234 = sphi 0, %s218
      %s240 = sphi 0, %s242
      %s243 = sphi 0, %s240
      %s244 = sphi 0, %s243
      %s260 = sphi 0, %s244
      %s266 = sphi 0, %s268
      %s269 = sphi 0, %s266
      %s270 = sphi 0, %s269
      %s286 = sphi 0, %s270
      %s292 = sphi 0, %s294
      %s295 = sphi 0, %s292
      %s296 = sphi 0, %s295
      %s312 = sphi 0, %s296
      %s318 = sphi 0, %s320
      %s321 = sphi 0, %s318
      %s322 = sphi 0, %s321
      %s338 = sphi 0, %s322
      %s344 = sphi 0, %s346
      %s347 = sphi 0, %s344
      %s348 = sphi 0, %s347
      %s364 = sphi 0, %s348
      %s370 = sphi 0, %s372
      %s373 = sphi 0, %s370
      %s374 = sphi 0, %s373
      %s390 = sphi 0, %s374
      %s396 = sphi 0, %s398
      %s399 = sphi 0, %s396
      %s400 = sphi 0, %s399
      %s416 = sphi 0, %s400
      %s422 = sphi 0, %s424
      %s425 = sphi 0, %s422
      %s426 = sphi 0, %s425
      %s442 = sphi 0, %s426
      %s448 = sphi 0, %s450
      %s451 = sphi 0, %s448
      %s452 = sphi 0, %s451
      %s468 = sphi 0, %s452
    $region4: #{distilbert_forward.1} parent=1 // loop_header_branch
      %28 = sbr.rel (%p26) target = $region8
    $region5: #{distilbert_forward.1} parent=1 // loop_body
      %s30 = ssub.s32 %s25, 1
      %s31 = ssub.s32 %s25, 2
      %s38 = sadd.s32 1, %s33
      %p39 = scmp.ge.s32.totalorder %s38, 2
      %s40 = scalar_select %p39, 0, %s38
      %s41 = sadd.s32 1, %s32
      %s42 = scalar_select %p39, %s41, %s32
      %p43 = scmp.ge.s32.totalorder %s42, 2
      %s44 = scalar_select %p43, 0, %s42
      %s45 = ssub.s32 %s32, %s44
      %p46 = scmp.eq.s32.totalorder %s45, 0
      %s48 = sadd.s32 %s47, 1
      %s49 = scalar_select %p46, %s47, %s48
      %p52 = pneg %p46
      %p53 = scmp.eq.s32.totalorder %s25, 3
      %p54 = por %p52, %p53
      %p55 = scmp.ne.s32.totalorder %s47, %s50
      %p56 = scmp.eq.s32.totalorder %s25, 0
      %p57 = por %p55, %p56
      %p58 = scmp.ne.s32.totalorder %s47, %s50
      %p59 = scmp.eq.s32.totalorder %s30, 3
      %p60 = por %p58, %p59
      %p61 = scmp.ne.s32.totalorder %s50, %s51
      %p62 = scmp.eq.s32.totalorder %s30, 0
      %p63 = por %p61, %p62
      %p64 = scmp.ne.s32.totalorder %s50, %s51
      %p65 = scmp.eq.s32.totalorder %s31, 3
      %p66 = por %p64, %p65
      %p68 = scmp.ne.s32.totalorder %s51, %s67
      %p69 = scmp.eq.s32.totalorder %s31, 0
      %p70 = por %p68, %p69
      %s72 = sadd.s32 %s71, 1
      %p75 = scmp.eq.s32.totalorder %s25, 3
      %p76 = scmp.ne.s32.totalorder %s71, %s73
      %p77 = scmp.eq.s32.totalorder %s25, 0
      %p78 = por %p76, %p77
      %p79 = scmp.ne.s32.totalorder %s71, %s73
      %p80 = scmp.eq.s32.totalorder %s30, 3
      %p81 = por %p79, %p80
      %p82 = scmp.ne.s32.totalorder %s73, %s74
      %p83 = scmp.eq.s32.totalorder %s30, 0
      %p84 = por %p82, %p83
      %p85 = scmp.ne.s32.totalorder %s73, %s74
      %p86 = scmp.eq.s32.totalorder %s31, 3
      %p87 = por %p85, %p86
      %p89 = scmp.ne.s32.totalorder %s74, %s88
      %p90 = scmp.eq.s32.totalorder %s31, 0
      %p91 = por %p89, %p90
      %s93 = sadd.s32 %s92, 1
      %p96 = scmp.eq.s32.totalorder %s25, 3
      %p97 = scmp.ne.s32.totalorder %s92, %s94
      %p98 = scmp.eq.s32.totalorder %s25, 0
      %p99 = por %p97, %p98
      %p100 = scmp.ne.s32.totalorder %s92, %s94
      %p101 = scmp.eq.s32.totalorder %s30, 3
      %p102 = por %p100, %p101
      %p103 = scmp.ne.s32.totalorder %s94, %s95
      %p104 = scmp.eq.s32.totalorder %s30, 0
      %p105 = por %p103, %p104
      %p106 = scmp.ne.s32.totalorder %s94, %s95
      %p107 = scmp.eq.s32.totalorder %s31, 3
      %p108 = por %p106, %p107
      %p110 = scmp.ne.s32.totalorder %s95, %s109
      %p111 = scmp.eq.s32.totalorder %s31, 0
      %p112 = por %p110, %p111
      %s114 = sadd.s32 %s113, 1
      %p117 = scmp.eq.s32.totalorder %s25, 3
      %p118 = scmp.ne.s32.totalorder %s113, %s115
      %p119 = scmp.eq.s32.totalorder %s25, 0
      %p120 = por %p118, %p119
      %p121 = scmp.ne.s32.totalorder %s113, %s115
      %p122 = scmp.eq.s32.totalorder %s30, 3
      %p123 = por %p121, %p122
      %p124 = scmp.ne.s32.totalorder %s115, %s116
      %p125 = scmp.eq.s32.totalorder %s30, 0
      %p126 = por %p124, %p125
      %p127 = scmp.ne.s32.totalorder %s115, %s116
      %p128 = scmp.eq.s32.totalorder %s31, 3
      %p129 = por %p127, %p128
      %p131 = scmp.ne.s32.totalorder %s116, %s130
      %p132 = scmp.eq.s32.totalorder %s31, 0
      %p133 = por %p131, %p132
      %s134 = ssub.s32 %s33, %s40
      %p135 = scmp.eq.s32.totalorder %s134, 0
      %s137 = sadd.s32 %s136, 1
      %s138 = scalar_select %p135, %s136, %s137
      %p141 = pneg %p135
      %p142 = scmp.eq.s32.totalorder %s25, 3
      %p143 = por %p141, %p142
      %p144 = scmp.ne.s32.totalorder %s136, %s139
      %p145 = scmp.eq.s32.totalorder %s25, 0
      %p146 = por %p144, %p145
      %p147 = scmp.ne.s32.totalorder %s136, %s139
      %p148 = scmp.eq.s32.totalorder %s30, 3
      %p149 = por %p147, %p148
      %p150 = scmp.ne.s32.totalorder %s139, %s140
      %p151 = scmp.eq.s32.totalorder %s30, 0
      %p152 = por %p150, %p151
      %p153 = scmp.ne.s32.totalorder %s139, %s140
      %p154 = scmp.eq.s32.totalorder %s31, 3
      %p155 = por %p153, %p154
      %p157 = scmp.ne.s32.totalorder %s140, %s156
      %p158 = scmp.eq.s32.totalorder %s31, 0
      %p159 = por %p157, %p158
      %s160 = ssub.s32 %s33, %s40
      %p161 = scmp.eq.s32.totalorder %s160, 0
      %s163 = sadd.s32 %s162, 1
      %s164 = scalar_select %p161, %s162, %s163
      %p167 = pneg %p161
      %p168 = scmp.eq.s32.totalorder %s25, 3
      %p169 = por %p167, %p168
      %p170 = scmp.ne.s32.totalorder %s162, %s165
      %p171 = scmp.eq.s32.totalorder %s25, 0
      %p172 = por %p170, %p171
      %p173 = scmp.ne.s32.totalorder %s162, %s165
      %p174 = scmp.eq.s32.totalorder %s30, 3
      %p175 = por %p173, %p174
      %p176 = scmp.ne.s32.totalorder %s165, %s166
      %p177 = scmp.eq.s32.totalorder %s30, 0
      %p178 = por %p176, %p177
      %p179 = scmp.ne.s32.totalorder %s165, %s166
      %p180 = scmp.eq.s32.totalorder %s31, 3
      %p181 = por %p179, %p180
      %p183 = scmp.ne.s32.totalorder %s166, %s182
      %p184 = scmp.eq.s32.totalorder %s31, 0
      %p185 = por %p183, %p184
      %s186 = ssub.s32 %s33, %s40
      %p187 = scmp.eq.s32.totalorder %s186, 0
      %s189 = sadd.s32 %s188, 1
      %s190 = scalar_select %p187, %s188, %s189
      %p193 = pneg %p187
      %p194 = scmp.eq.s32.totalorder %s25, 3
      %p195 = por %p193, %p194
      %p196 = scmp.ne.s32.totalorder %s188, %s191
      %p197 = scmp.eq.s32.totalorder %s25, 0
      %p198 = por %p196, %p197
      %p199 = scmp.ne.s32.totalorder %s188, %s191
      %p200 = scmp.eq.s32.totalorder %s30, 3
      %p201 = por %p199, %p200
      %p202 = scmp.ne.s32.totalorder %s191, %s192
      %p203 = scmp.eq.s32.totalorder %s30, 0
      %p204 = por %p202, %p203
      %p205 = scmp.ne.s32.totalorder %s191, %s192
      %p206 = scmp.eq.s32.totalorder %s31, 3
      %p207 = por %p205, %p206
      %p209 = scmp.ne.s32.totalorder %s192, %s208
      %p210 = scmp.eq.s32.totalorder %s31, 0
      %p211 = por %p209, %p210
      %s212 = ssub.s32 %s33, %s40
      %p213 = scmp.eq.s32.totalorder %s212, 0
      %s215 = sadd.s32 %s214, 1
      %s216 = scalar_select %p213, %s214, %s215
      %p219 = pneg %p213
      %p220 = scmp.eq.s32.totalorder %s25, 3
      %p221 = por %p219, %p220
      %p222 = scmp.ne.s32.totalorder %s214, %s217
      %p223 = scmp.eq.s32.totalorder %s25, 0
      %p224 = por %p222, %p223
      %p225 = scmp.ne.s32.totalorder %s214, %s217
      %p226 = scmp.eq.s32.totalorder %s30, 3
      %p227 = por %p225, %p226
      %p228 = scmp.ne.s32.totalorder %s217, %s218
      %p229 = scmp.eq.s32.totalorder %s30, 0
      %p230 = por %p228, %p229
      %p231 = scmp.ne.s32.totalorder %s217, %s218
      %p232 = scmp.eq.s32.totalorder %s31, 3
      %p233 = por %p231, %p232
      %p235 = scmp.ne.s32.totalorder %s218, %s234
      %p236 = scmp.eq.s32.totalorder %s31, 0
      %p237 = por %p235, %p236
      %s238 = ssub.s32 %s33, %s40
      %p239 = scmp.eq.s32.totalorder %s238, 0
      %s241 = sadd.s32 %s240, 1
      %s242 = scalar_select %p239, %s240, %s241
      %p245 = pneg %p239
      %p246 = scmp.eq.s32.totalorder %s25, 3
      %p247 = por %p245, %p246
      %p248 = scmp.ne.s32.totalorder %s240, %s243
      %p249 = scmp.eq.s32.totalorder %s25, 0
      %p250 = por %p248, %p249
      %p251 = scmp.ne.s32.totalorder %s240, %s243
      %p252 = scmp.eq.s32.totalorder %s30, 3
      %p253 = por %p251, %p252
      %p254 = scmp.ne.s32.totalorder %s243, %s244
      %p255 = scmp.eq.s32.totalorder %s30, 0
      %p256 = por %p254, %p255
      %p257 = scmp.ne.s32.totalorder %s243, %s244
      %p258 = scmp.eq.s32.totalorder %s31, 3
      %p259 = por %p257, %p258
      %p261 = scmp.ne.s32.totalorder %s244, %s260
      %p262 = scmp.eq.s32.totalorder %s31, 0
      %p263 = por %p261, %p262
      %s264 = ssub.s32 %s33, %s40
      %p265 = scmp.eq.s32.totalorder %s264, 0
      %s267 = sadd.s32 %s266, 1
      %s268 = scalar_select %p265, %s266, %s267
      %p271 = pneg %p265
      %p272 = scmp.eq.s32.totalorder %s25, 3
      %p273 = por %p271, %p272
      %p274 = scmp.ne.s32.totalorder %s266, %s269
      %p275 = scmp.eq.s32.totalorder %s25, 0
      %p276 = por %p274, %p275
      %p277 = scmp.ne.s32.totalorder %s266, %s269
      %p278 = scmp.eq.s32.totalorder %s30, 3
      %p279 = por %p277, %p278
      %p280 = scmp.ne.s32.totalorder %s269, %s270
      %p281 = scmp.eq.s32.totalorder %s30, 0
      %p282 = por %p280, %p281
      %p283 = scmp.ne.s32.totalorder %s269, %s270
      %p284 = scmp.eq.s32.totalorder %s31, 3
      %p285 = por %p283, %p284
      %p287 = scmp.ne.s32.totalorder %s270, %s286
      %p288 = scmp.eq.s32.totalorder %s31, 0
      %p289 = por %p287, %p288
      %s290 = ssub.s32 %s33, %s40
      %p291 = scmp.eq.s32.totalorder %s290, 0
      %s293 = sadd.s32 %s292, 1
      %s294 = scalar_select %p291, %s292, %s293
      %p297 = pneg %p291
      %p298 = scmp.eq.s32.totalorder %s25, 3
      %p299 = por %p297, %p298
      %p300 = scmp.ne.s32.totalorder %s292, %s295
      %p301 = scmp.eq.s32.totalorder %s25, 0
      %p302 = por %p300, %p301
      %p303 = scmp.ne.s32.totalorder %s292, %s295
      %p304 = scmp.eq.s32.totalorder %s30, 3
      %p305 = por %p303, %p304
      %p306 = scmp.ne.s32.totalorder %s295, %s296
      %p307 = scmp.eq.s32.totalorder %s30, 0
      %p308 = por %p306, %p307
      %p309 = scmp.ne.s32.totalorder %s295, %s296
      %p310 = scmp.eq.s32.totalorder %s31, 3
      %p311 = por %p309, %p310
      %p313 = scmp.ne.s32.totalorder %s296, %s312
      %p314 = scmp.eq.s32.totalorder %s31, 0
      %p315 = por %p313, %p314
      %s316 = ssub.s32 %s33, %s40
      %p317 = scmp.eq.s32.totalorder %s316, 0
      %s319 = sadd.s32 %s318, 1
      %s320 = scalar_select %p317, %s318, %s319
      %p323 = pneg %p317
      %p324 = scmp.eq.s32.totalorder %s25, 3
      %p325 = por %p323, %p324
      %p326 = scmp.ne.s32.totalorder %s318, %s321
      %p327 = scmp.eq.s32.totalorder %s25, 0
      %p328 = por %p326, %p327
      %p329 = scmp.ne.s32.totalorder %s318, %s321
      %p330 = scmp.eq.s32.totalorder %s30, 3
      %p331 = por %p329, %p330
      %p332 = scmp.ne.s32.totalorder %s321, %s322
      %p333 = scmp.eq.s32.totalorder %s30, 0
      %p334 = por %p332, %p333
      %p335 = scmp.ne.s32.totalorder %s321, %s322
      %p336 = scmp.eq.s32.totalorder %s31, 3
      %p337 = por %p335, %p336
      %p339 = scmp.ne.s32.totalorder %s322, %s338
      %p340 = scmp.eq.s32.totalorder %s31, 0
      %p341 = por %p339, %p340
      %s342 = ssub.s32 %s33, %s40
      %p343 = scmp.eq.s32.totalorder %s342, 0
      %s345 = sadd.s32 %s344, 1
      %s346 = scalar_select %p343, %s344, %s345
      %p349 = pneg %p343
      %p350 = scmp.eq.s32.totalorder %s25, 3
      %p351 = por %p349, %p350
      %p352 = scmp.ne.s32.totalorder %s344, %s347
      %p353 = scmp.eq.s32.totalorder %s25, 0
      %p354 = por %p352, %p353
      %p355 = scmp.ne.s32.totalorder %s344, %s347
      %p356 = scmp.eq.s32.totalorder %s30, 3
      %p357 = por %p355, %p356
      %p358 = scmp.ne.s32.totalorder %s347, %s348
      %p359 = scmp.eq.s32.totalorder %s30, 0
      %p360 = por %p358, %p359
      %p361 = scmp.ne.s32.totalorder %s347, %s348
      %p362 = scmp.eq.s32.totalorder %s31, 3
      %p363 = por %p361, %p362
      %p365 = scmp.ne.s32.totalorder %s348, %s364
      %p366 = scmp.eq.s32.totalorder %s31, 0
      %p367 = por %p365, %p366
      %s368 = ssub.s32 %s33, %s40
      %p369 = scmp.eq.s32.totalorder %s368, 0
      %s371 = sadd.s32 %s370, 1
      %s372 = scalar_select %p369, %s370, %s371
      %p375 = pneg %p369
      %p376 = scmp.eq.s32.totalorder %s25, 3
      %p377 = por %p375, %p376
      %p378 = scmp.ne.s32.totalorder %s370, %s373
      %p379 = scmp.eq.s32.totalorder %s25, 0
      %p380 = por %p378, %p379
      %p381 = scmp.ne.s32.totalorder %s370, %s373
      %p382 = scmp.eq.s32.totalorder %s30, 3
      %p383 = por %p381, %p382
      %p384 = scmp.ne.s32.totalorder %s373, %s374
      %p385 = scmp.eq.s32.totalorder %s30, 0
      %p386 = por %p384, %p385
      %p387 = scmp.ne.s32.totalorder %s373, %s374
      %p388 = scmp.eq.s32.totalorder %s31, 3
      %p389 = por %p387, %p388
      %p391 = scmp.ne.s32.totalorder %s374, %s390
      %p392 = scmp.eq.s32.totalorder %s31, 0
      %p393 = por %p391, %p392
      %s394 = ssub.s32 %s33, %s40
      %p395 = scmp.eq.s32.totalorder %s394, 0
      %s397 = sadd.s32 %s396, 1
      %s398 = scalar_select %p395, %s396, %s397
      %p401 = pneg %p395
      %p402 = scmp.eq.s32.totalorder %s25, 3
      %p403 = por %p401, %p402
      %p404 = scmp.ne.s32.totalorder %s396, %s399
      %p405 = scmp.eq.s32.totalorder %s25, 0
      %p406 = por %p404, %p405
      %p407 = scmp.ne.s32.totalorder %s396, %s399
      %p408 = scmp.eq.s32.totalorder %s30, 3
      %p409 = por %p407, %p408
      %p410 = scmp.ne.s32.totalorder %s399, %s400
      %p411 = scmp.eq.s32.totalorder %s30, 0
      %p412 = por %p410, %p411
      %p413 = scmp.ne.s32.totalorder %s399, %s400
      %p414 = scmp.eq.s32.totalorder %s31, 3
      %p415 = por %p413, %p414
      %p417 = scmp.ne.s32.totalorder %s400, %s416
      %p418 = scmp.eq.s32.totalorder %s31, 0
      %p419 = por %p417, %p418
      %s420 = ssub.s32 %s33, %s40
      %p421 = scmp.eq.s32.totalorder %s420, 0
      %s423 = sadd.s32 %s422, 1
      %s424 = scalar_select %p421, %s422, %s423
      %p427 = pneg %p421
      %p428 = scmp.eq.s32.totalorder %s25, 3
      %p429 = por %p427, %p428
      %p430 = scmp.ne.s32.totalorder %s422, %s425
      %p431 = scmp.eq.s32.totalorder %s25, 0
      %p432 = por %p430, %p431
      %p433 = scmp.ne.s32.totalorder %s422, %s425
      %p434 = scmp.eq.s32.totalorder %s30, 3
      %p435 = por %p433, %p434
      %p436 = scmp.ne.s32.totalorder %s425, %s426
      %p437 = scmp.eq.s32.totalorder %s30, 0
      %p438 = por %p436, %p437
      %p439 = scmp.ne.s32.totalorder %s425, %s426
      %p440 = scmp.eq.s32.totalorder %s31, 3
      %p441 = por %p439, %p440
      %p443 = scmp.ne.s32.totalorder %s426, %s442
      %p444 = scmp.eq.s32.totalorder %s31, 0
      %p445 = por %p443, %p444
      %s446 = ssub.s32 %s32, %s44
      %p447 = scmp.eq.s32.totalorder %s446, 0
      %s449 = sadd.s32 %s448, 1
      %s450 = scalar_select %p447, %s448, %s449
      %p453 = pneg %p447
      %p454 = scmp.eq.s32.totalorder %s25, 3
      %p455 = por %p453, %p454
      %p456 = scmp.ne.s32.totalorder %s448, %s451
      %p457 = scmp.eq.s32.totalorder %s25, 0
      %p458 = por %p456, %p457
      %p459 = scmp.ne.s32.totalorder %s448, %s451
      %p460 = scmp.eq.s32.totalorder %s30, 3
      %p461 = por %p459, %p460
      %p462 = scmp.ne.s32.totalorder %s451, %s452
      %p463 = scmp.eq.s32.totalorder %s30, 0
      %p464 = por %p462, %p463
      %p465 = scmp.ne.s32.totalorder %s451, %s452
      %p466 = scmp.eq.s32.totalorder %s31, 3
      %p467 = por %p465, %p466
      %p469 = scmp.ne.s32.totalorder %s452, %s468
      %p470 = scmp.eq.s32.totalorder %s31, 0
      %p471 = por %p469, %p470
      %p472 = scmp.le.s32.totalorder 1, %s25
      %p473 = scmp.lt.s32.totalorder %s25, 5
      %p474 = pnand %p472, %p473
      %p475 = pneg %p474
      // Predicated region
      $region9: #{distilbert_forward.1} parent=5 // pred_check
        _
      $region10: #{distilbert_forward.1} parent=5 // pred_check_branch
        %477 = sbr.rel (%p474) target = $region12
      $region11: #{distilbert_forward.1} parent=5 // pred_region
        %s478 = ssub.s32 %s25, 1
        // Predicated region
        $region13: #{distilbert_forward.1} parent=11 // pred_check
          %p479 = pneg %p84
        $region14: #{distilbert_forward.1} parent=11 // pred_check_branch
          %481 = sbr.rel (%p479) target = $region16
        $region15: #{distilbert_forward.1} parent=11 // pred_region
          _
        $region16: #{distilbert_forward.1} parent=11 // pred_fallthru
          _
        // Predicated region
        $region17: #{distilbert_forward.1} parent=11 // pred_check
          %p482 = pneg %p105
        $region18: #{distilbert_forward.1} parent=11 // pred_check_branch
          %484 = sbr.rel (%p482) target = $region20
        $region19: #{distilbert_forward.1} parent=11 // pred_region
          _
        $region20: #{distilbert_forward.1} parent=11 // pred_fallthru
          _
        // Predicated region
        $region21: #{distilbert_forward.1} parent=11 // pred_check
          %p485 = pneg %p126
        $region22: #{distilbert_forward.1} parent=11 // pred_check_branch
          %487 = sbr.rel (%p485) target = $region24
        $region23: #{distilbert_forward.1} parent=11 // pred_region
          _
        $region24: #{distilbert_forward.1} parent=11 // pred_fallthru
          _
      $region12: #{distilbert_forward.1} parent=5 // pred_fallthru
        _
      %p488 = scmp.lt.s32.totalorder %s25, 4
      // Predicated region
      $region25: #{distilbert_forward.1} parent=5 // pred_check
        %p489 = pneg %p488
      $region26: #{distilbert_forward.1} parent=5 // pred_check_branch
        %491 = sbr.rel (%p489) target = $region28
      $region27: #{distilbert_forward.1} parent=5 // pred_region
        // Predicated region
        $region29: #{distilbert_forward.1} parent=27 // pred_check
          %p492 = pneg %p57
        $region30: #{distilbert_forward.1} parent=27 // pred_check_branch
          %494 = sbr.rel (%p492) target = $region32
        $region31: #{distilbert_forward.1} parent=27 // pred_region
          %p495 = scmp.lt.s32.totalorder %s32, 1
          %s496 = scalar_select %p495, %s32, 1
          %s497 = smul.addr %s496, 8
          %s498 = scalar_lea.vmem %s0, %s497
        $region32: #{distilbert_forward.1} parent=27 // pred_fallthru
          _
        // Predicated region
        $region33: #{distilbert_forward.1} parent=27 // pred_check
          %p499 = pneg %p146
        $region34: #{distilbert_forward.1} parent=27 // pred_check_branch
          %501 = sbr.rel (%p499) target = $region36
        $region35: #{distilbert_forward.1} parent=27 // pred_region
          %p502 = scmp.lt.s32.totalorder %s33, 1
          %s503 = scalar_select %p502, %s33, 1
          %s504 = smul.addr %s503, 4
          %s505 = smul.addr %s504, 4
          %s506 = scalar_lea.vmem %s4, %s505
        $region36: #{distilbert_forward.1} parent=27 // pred_fallthru
          _
        // Predicated region
        $region37: #{distilbert_forward.1} parent=27 // pred_check
          %p507 = pneg %p172
        $region38: #{distilbert_forward.1} parent=27 // pred_check_branch
          %509 = sbr.rel (%p507) target = $region40
        $region39: #{distilbert_forward.1} parent=27 // pred_region
          %p510 = scmp.lt.s32.totalorder %s33, 1
          %s511 = scalar_select %p510, %s33, 1
          %s512 = scalar_lea.vmem %s5, %s511
        $region40: #{distilbert_forward.1} parent=27 // pred_fallthru
          _
        // Predicated region
        $region41: #{distilbert_forward.1} parent=27 // pred_check
          %p513 = pneg %p198
        $region42: #{distilbert_forward.1} parent=27 // pred_check_branch
          %515 = sbr.rel (%p513) target = $region44
        $region43: #{distilbert_forward.1} parent=27 // pred_region
          %p516 = scmp.lt.s32.totalorder %s33, 1
          %s517 = scalar_select %p516, %s33, 1
          %s518 = smul.addr %s517, 4
          %s519 = smul.addr %s518, 4
          %s520 = scalar_lea.vmem %s6, %s519
        $region44: #{distilbert_forward.1} parent=27 // pred_fallthru
          _
        // Predicated region
        $region45: #{distilbert_forward.1} parent=27 // pred_check
          %p521 = pneg %p224
        $region46: #{distilbert_forward.1} parent=27 // pred_check_branch
          %523 = sbr.rel (%p521) target = $region48
        $region47: #{distilbert_forward.1} parent=27 // pred_region
          %p524 = scmp.lt.s32.totalorder %s33, 1
          %s525 = scalar_select %p524, %s33, 1
          %s526 = scalar_lea.vmem %s7, %s525
        $region48: #{distilbert_forward.1} parent=27 // pred_fallthru
          _
        // Predicated region
        $region49: #{distilbert_forward.1} parent=27 // pred_check
          %p527 = pneg %p250
        $region50: #{distilbert_forward.1} parent=27 // pred_check_branch
          %529 = sbr.rel (%p527) target = $region52
        $region51: #{distilbert_forward.1} parent=27 // pred_region
          %p530 = scmp.lt.s32.totalorder %s33, 1
          %s531 = scalar_select %p530, %s33, 1
          %s532 = scalar_lea.vmem %s8, %s531
        $region52: #{distilbert_forward.1} parent=27 // pred_fallthru
          _
        // Predicated region
        $region53: #{distilbert_forward.1} parent=27 // pred_check
          %p533 = pneg %p276
        $region54: #{distilbert_forward.1} parent=27 // pred_check_branch
          %535 = sbr.rel (%p533) target = $region56
        $region55: #{distilbert_forward.1} parent=27 // pred_region
          %p536 = scmp.lt.s32.totalorder %s33, 1
          %s537 = scalar_select %p536, %s33, 1
          %s538 = scalar_lea.vmem %s9, %s537
        $region56: #{distilbert_forward.1} parent=27 // pred_fallthru
          _
        // Predicated region
        $region57: #{distilbert_forward.1} parent=27 // pred_check
          %p539 = pneg %p302
        $region58: #{distilbert_forward.1} parent=27 // pred_check_branch
          %541 = sbr.rel (%p539) target = $region60
        $region59: #{distilbert_forward.1} parent=27 // pred_region
          %p542 = scmp.lt.s32.totalorder %s33, 1
          %s543 = scalar_select %p542, %s33, 1
          %s544 = smul.addr %s543, 4
          %s545 = smul.addr %s544, 4
          %s546 = scalar_lea.vmem %s10, %s545
        $region60: #{distilbert_forward.1} parent=27 // pred_fallthru
          _
        // Predicated region
        $region61: #{distilbert_forward.1} parent=27 // pred_check
          %p547 = pneg %p328
        $region62: #{distilbert_forward.1} parent=27 // pred_check_branch
          %549 = sbr.rel (%p547) target = $region64
        $region63: #{distilbert_forward.1} parent=27 // pred_region
          %p550 = scmp.lt.s32.totalorder %s33, 1
          %s551 = scalar_select %p550, %s33, 1
          %s552 = scalar_lea.vmem %s11, %s551
        $region64: #{distilbert_forward.1} parent=27 // pred_fallthru
          _
        // Predicated region
        $region65: #{distilbert_forward.1} parent=27 // pred_check
          %p553 = pneg %p354
        $region66: #{distilbert_forward.1} parent=27 // pred_check_branch
          %555 = sbr.rel (%p553) target = $region68
        $region67: #{distilbert_forward.1} parent=27 // pred_region
          %p556 = scmp.lt.s32.totalorder %s33, 1
          %s557 = scalar_select %p556, %s33, 1
          %s558 = smul.addr %s557, 8
          %s559 = smul.addr %s558, 4
          %s560 = scalar_lea.vmem %s12, %s559
        $region68: #{distilbert_forward.1} parent=27 // pred_fallthru
          _
        // Predicated region
        $region69: #{distilbert_forward.1} parent=27 // pred_check
          %p561 = pneg %p380
        $region70: #{distilbert_forward.1} parent=27 // pred_check_branch
          %563 = sbr.rel (%p561) target = $region72
        $region71: #{distilbert_forward.1} parent=27 // pred_region
          %p564 = scmp.lt.s32.totalorder %s33, 1
          %s565 = scalar_select %p564, %s33, 1
          %s566 = scalar_lea.vmem %s13, %s565
        $region72: #{distilbert_forward.1} parent=27 // pred_fallthru
          _
        // Predicated region
        $region73: #{distilbert_forward.1} parent=27 // pred_check
          %p567 = pneg %p406
        $region74: #{distilbert_forward.1} parent=27 // pred_check_branch
          %569 = sbr.rel (%p567) target = $region76
        $region75: #{distilbert_forward.1} parent=27 // pred_region
          %p570 = scmp.lt.s32.totalorder %s33, 1
          %s571 = scalar_select %p570, %s33, 1
          %s572 = scalar_lea.vmem %s14, %s571
        $region76: #{distilbert_forward.1} parent=27 // pred_fallthru
          _
        // Predicated region
        $region77: #{distilbert_forward.1} parent=27 // pred_check
          %p573 = pneg %p432
        $region78: #{distilbert_forward.1} parent=27 // pred_check_branch
          %575 = sbr.rel (%p573) target = $region80
        $region79: #{distilbert_forward.1} parent=27 // pred_region
          %p576 = scmp.lt.s32.totalorder %s33, 1
          %s577 = scalar_select %p576, %s33, 1
          %s578 = scalar_lea.vmem %s15, %s577
        $region80: #{distilbert_forward.1} parent=27 // pred_fallthru
          _
      $region28: #{distilbert_forward.1} parent=5 // pred_fallthru
        _
      %p579 = scmp.le.s32.totalorder 1, %s25
      %p580 = scmp.lt.s32.totalorder %s25, 5
      %p581 = pnand %p579, %p580
      %p582 = pneg %p581
      // Predicated region
      $region81: #{distilbert_forward.1} parent=5 // pred_check
        _
      $region82: #{distilbert_forward.1} parent=5 // pred_check_branch
        %584 = sbr.rel (%p581) target = $region84
      $region83: #{distilbert_forward.1} parent=5 // pred_region
        %s585 = ssub.s32 %s25, 1
        %p586 = scmp.lt.s32.totalorder %s34, 1
        %s587 = scalar_select %p586, %s34, 1
        %s588 = smul.addr %s587, 8
        %s589 = scalar_lea.vmem %s0, %s588
        %p590 = pneg %p63
        %p591 = pneg %p60
        %p592 = pneg %p84
        %p593 = pneg %p81
        %p594 = pneg %p105
        %p595 = pneg %p102
        %p596 = pneg %p126
        %p597 = pneg %p123
        %p598 = scmp.lt.s32.totalorder %s35, 1
        %s599 = scalar_select %p598, %s35, 1
        %s600 = smul.addr %s599, 4
        %s601 = smul.addr %s600, 4
        %s602 = scalar_lea.vmem %s4, %s601
        %p603 = pneg %p152
        %p604 = pneg %p149
        %p605 = scmp.lt.s32.totalorder %s35, 1
        %s606 = scalar_select %p605, %s35, 1
        %s607 = scalar_lea.vmem %s5, %s606
        %p608 = pneg %p178
        %p609 = pneg %p175
        %p610 = scmp.lt.s32.totalorder %s35, 1
        %s611 = scalar_select %p610, %s35, 1
        %s612 = smul.addr %s611, 4
        %s613 = smul.addr %s612, 4
        %s614 = scalar_lea.vmem %s6, %s613
        %p615 = pneg %p204
        %p616 = pneg %p201
        %p617 = scmp.lt.s32.totalorder %s35, 1
        %s618 = scalar_select %p617, %s35, 1
        %s619 = scalar_lea.vmem %s7, %s618
        %p620 = pneg %p230
        %p621 = pneg %p227
        %p622 = scmp.lt.s32.totalorder %s35, 1
        %s623 = scalar_select %p622, %s35, 1
        %s624 = scalar_lea.vmem %s8, %s623
        %p625 = pneg %p256
        %p626 = pneg %p253
        %p627 = scmp.lt.s32.totalorder %s35, 1
        %s628 = scalar_select %p627, %s35, 1
        %s629 = scalar_lea.vmem %s9, %s628
        %p630 = pneg %p282
        %p631 = pneg %p279
        %p632 = scmp.lt.s32.totalorder %s35, 1
        %s633 = scalar_select %p632, %s35, 1
        %s634 = smul.addr %s633, 4
        %s635 = smul.addr %s634, 4
        %s636 = scalar_lea.vmem %s10, %s635
        %p637 = pneg %p308
        %p638 = pneg %p305
        %p639 = scmp.lt.s32.totalorder %s35, 1
        %s640 = scalar_select %p639, %s35, 1
        %s641 = scalar_lea.vmem %s11, %s640
        %p642 = pneg %p334
        %p643 = pneg %p331
        %p644 = scmp.lt.s32.totalorder %s35, 1
        %s645 = scalar_select %p644, %s35, 1
        %s646 = smul.addr %s645, 8
        %s647 = smul.addr %s646, 4
        %s648 = scalar_lea.vmem %s12, %s647
        %p649 = pneg %p360
        %p650 = pneg %p357
        %p651 = scmp.lt.s32.totalorder %s35, 1
        %s652 = scalar_select %p651, %s35, 1
        %s653 = scalar_lea.vmem %s13, %s652
        %p654 = pneg %p386
        %p655 = pneg %p383
        %p656 = scmp.lt.s32.totalorder %s35, 1
        %s657 = scalar_select %p656, %s35, 1
        %s658 = scalar_lea.vmem %s14, %s657
        %p659 = pneg %p412
        %p660 = pneg %p409
        %p661 = scmp.lt.s32.totalorder %s35, 1
        %s662 = scalar_select %p661, %s35, 1
        %s663 = scalar_lea.vmem %s15, %s662
        %p664 = pneg %p438
        %p665 = pneg %p435
        %p666 = pneg %p464
        %p667 = pneg %p461
        %s668 = sand.u32 %s451, 1
        %s669 = scalar_lea.sflag [#allocation3], %s668
        %s670 = sand.u32 %s451, 1
        %s671 = smul.addr %s670, 8
        %s672 = scalar_lea.vmem [#allocation2], %s671
        %p673 = scmp.lt.s32.totalorder %s34, 1
        %s674 = scalar_select %p673, %s34, 1
        %s675 = smul.addr %s674, 8
        %s676 = scalar_lea.vmem %s0, %s675
        %p677 = scmp.lt.s32.totalorder %s35, 1
        %s678 = scalar_select %p677, %s35, 1
        %s679 = smul.addr %s678, 4
        %s680 = smul.addr %s679, 4
        %s681 = scalar_lea.vmem %s4, %s680
        %p682 = scmp.lt.s32.totalorder %s35, 1
        %s683 = scalar_select %p682, %s35, 1
        %s684 = scalar_lea.vmem %s5, %s683
        %p685 = scmp.lt.s32.totalorder %s35, 1
        %s686 = scalar_select %p685, %s35, 1
        %s687 = smul.addr %s686, 4
        %s688 = smul.addr %s687, 4
        %s689 = scalar_lea.vmem %s6, %s688
        %p690 = scmp.lt.s32.totalorder %s35, 1
        %s691 = scalar_select %p690, %s35, 1
        %s692 = scalar_lea.vmem %s7, %s691
        %p693 = scmp.lt.s32.totalorder %s35, 1
        %s694 = scalar_select %p693, %s35, 1
        %s695 = scalar_lea.vmem %s8, %s694
        %p696 = scmp.lt.s32.totalorder %s35, 1
        %s697 = scalar_select %p696, %s35, 1
        %s698 = scalar_lea.vmem %s9, %s697
        %p699 = scmp.lt.s32.totalorder %s35, 1
        %s700 = scalar_select %p699, %s35, 1
        %s701 = smul.addr %s700, 4
        %s702 = smul.addr %s701, 4
        %s703 = scalar_lea.vmem %s10, %s702
        %p704 = scmp.lt.s32.totalorder %s35, 1
        %s705 = scalar_select %p704, %s35, 1
        %s706 = scalar_lea.vmem %s11, %s705
        %p707 = scmp.lt.s32.totalorder %s35, 1
        %s708 = scalar_select %p707, %s35, 1
        %s709 = smul.addr %s708, 8
        %s710 = smul.addr %s709, 4
        %s711 = scalar_lea.vmem %s12, %s710
        %p712 = scmp.lt.s32.totalorder %s35, 1
        %s713 = scalar_select %p712, %s35, 1
        %s714 = scalar_lea.vmem %s13, %s713
        %p715 = scmp.lt.s32.totalorder %s35, 1
        %s716 = scalar_select %p715, %s35, 1
        %s717 = scalar_lea.vmem %s14, %s716
        %p718 = scmp.lt.s32.totalorder %s35, 1
        %s719 = scalar_select %p718, %s35, 1
        %s720 = scalar_lea.vmem %s15, %s719
        %p722 = scmp.eq.s32.totalorder %s35, 0
        // Predicated region
        $region85: #{distilbert_forward.1} parent=83 // pred_check
          %p723 = pneg %p722
        $region86: #{distilbert_forward.1} parent=83 // pred_check_branch
          %725 = sbr.rel (%p723) target = $region88
        $region87: #{distilbert_forward.1} parent=83 // pred_region
          %v726 = vld [vmem:[%s676] sm:$0xff]
          %v727 = vld [vmem:[%s1] sm:$0xff]
          %v728 = vadd.f32 %v726, %v727
          %v729 = vld [vmem:[%s2] sm:$0x1]
          %v730 = vld [vmem:[%s3] sm:$0x1]
          %vm731 = vcmask 261120
          %v732 = vsel %vm731, %v728, 0.0
          %733 = vadd.xlane.f32.xlu0 %v732
          %v734 = vpop.xlane.xlu0 %733
          %v735 = vrcp.pop 32.0
          %v736 = vmul.f32 32.0, %v735
          %v737 = vsub.f32 1.0, %v736
          %v738 = vmul.f32 %v735, %v737
          %v739 = vadd.f32 %v735, %v738
          %vm740 = vweird.f32 %v735
          %v741 = vsel %vm740, %v735, %v739
          %v742 = vmul.f32 %v734, %v741
          %v743 = vsub.f32 %v728, %v742
          %v744 = vmul.f32 %v743, %v743
          %v745 = vsel %vm731, %v744, 0.0
          %746 = vadd.xlane.f32.xlu0 %v745
          %v747 = vpop.xlane.xlu0 %746
          %v748 = vmul.f32 %v747, %v741
          %v749 = vadd.f32 %v748, 1e-12
          %v750 = vrsqrt.pop %v749
          %v751 = vmul.f32 %v750, %v749
          %v752 = vmul.f32 %v751, %v750
          %v753 = vmul.f32 0.5, %v752
          %v754 = vsub.f32 1.5, %v753
          %v755 = vmul.f32 %v750, %v754
          %vm756 = vweird.f32 %v749
          %vm757 = vweird.f32 %v750
          %vm758 = vmor %vm756, %vm757
          %v759 = vsel %vm758, %v750, %v755
          %v760 = vmul.f32 %v743, %v759
          %v762 = vperm.slane %v729, 0
          %v764 = vmul.f32 %v760, %v762
          %v766 = vperm.slane %v730, 0
          %v768 = vadd.f32 %v764, %v766
          %769 = vst.msk [vmem:[%s672] sm:$0xff] %vm731, %v768
        $region88: #{distilbert_forward.1} parent=83 // pred_fallthru
          _
        %v770 = vld [vmem:[%s672] sm:$0xff]
        %v771 = vld [vmem:[%s681] sm:$0xf]
        %v772 = vld [vmem:[%s681 + $0x4] sm:$0xf]
        %v773 = vld [vmem:[%s681 + $0x8] sm:$0xf]
        %v774 = vld [vmem:[%s681 + $0xc] sm:$0xf]
        %v775 = vld [vmem:[%s684] sm:$0x1]
        %v776 = vpack.c.bf16 %v770, %v770
        %v778 = vperm.slane %v775, 0
        %v784 = vunpack.c.l.b16 %v771
        %v785 = vunpack.c.l.b16 %v772
        %v786 = vunpack.c.l.b16 %v773
        %v787 = vunpack.c.l.b16 %v774
        %v788 = vpack.c.b16 %v785, %v784
        %v789 = vpack.c.b16 %v787, %v786
        %vm792 = vcmask 261120
        %v794 = vsel %vm792, %v776, 0
        %796 = vmatpush.bf16.msra.mxu0 0
        %797 = vmatpush.bf16.msra.mxu0 0
        %798 = vmatpush.bf16.msra.mxu0 0
        %799 = vmatpush.bf16.msra.mxu0 0
        %800 = vmatpush.bf16.msra.mxu0 0
        %801 = vmatpush.bf16.msra.mxu0 0
        %802 = vmatpush.bf16.msra.mxu0 %v789
        %803 = vmatpush.bf16.msra.mxu0 %v788
        %804 = vmatmul.bf16.gmra.mxu0 %v794
        %v805 = vpop.f32.mrf.mxu0
        %v806 = vadd.f32 %v778, %v805
        %v807 = vpop.f32.mrf.mxu0
        %808 = vdwg.mxu0
        %v809 = vld [vmem:[%s689] sm:$0xf]
        %v810 = vld [vmem:[%s689 + $0x4] sm:$0xf]
        %v811 = vld [vmem:[%s689 + $0x8] sm:$0xf]
        %v812 = vld [vmem:[%s689 + $0xc] sm:$0xf]
        %v813 = vmul.f32 %v806, 0.35355338
        %v814 = vpack.c.bf16 %v813, %v813
        %v815 = vpack.c.bf16 %v806, %v806
        %817 = vrot.lane.b32.xlu0 %v815, 96
        %v818 = vpop.permute.xlu0 %817
        %vm819 = vcmask 64512
        %v821 = vsel %vm819, %v814, 0
        %v824 = vsel %vm819, %v818, 0
        %826 = vmatpush.bf16.xpose.msra.mxu0 0
        %827 = vmatpush.bf16.xpose.msra.mxu0 0
        %828 = vmatpush.bf16.xpose.msra.mxu0 0
        %829 = vmatpush.bf16.xpose.msra.mxu0 0
        %830 = vmatpush.bf16.xpose.msra.mxu0 0
        %831 = vmatpush.bf16.xpose.msra.mxu0 0
        %832 = vmatpush.bf16.xpose.msra.mxu0 0
        %833 = vmatpush.bf16.xpose.msra.mxu0 %v824
        %834 = vmatmul.bf16.gmra.mxu0 %v821
        %v835 = vpop.f32.mrf.mxu0
        %v836 = vadd.f32 0.0, %v835
        %v837 = vpop.f32.mrf.mxu0
        %838 = vdwg.mxu0
        %v839 = vsel %vm819, %v836, -inf
        %840 = vmax.xlane.f32.xlu0 %v839
        %v841 = vpop.xlane.xlu0 %840
        %v842 = vsub.f32 %v836, %v841
        %v843 = vmul.f32 %v842, 1.442695
        %v844 = vpow.pop %v843
        %v845 = vsel %vm819, %v844, 0.0
        %846 = vadd.xlane.f32.xlu0 %v845
        %v847 = vpop.xlane.xlu0 %846
        %v848 = vrcp.pop %v847
        %v849 = vmul.f32 %v844, %v848
        %v850 = vpack.c.bf16 %v849, %v849
        %851 = vrot.lane.b32.xlu0 %v815, 64
        %v852 = vpop.permute.xlu0 %851
        %v854 = vsel %vm819, %v850, 0
        %vm856 = vcmask 1043456
        %v858 = vsel %vm856, %v852, 0
        %860 = vmatpush.bf16.msra.mxu0 0
        %861 = vmatpush.bf16.msra.mxu0 0
        %862 = vmatpush.bf16.msra.mxu0 0
        %863 = vmatpush.bf16.msra.mxu0 0
        %864 = vmatpush.bf16.msra.mxu0 0
        %865 = vmatpush.bf16.msra.mxu0 0
        %866 = vmatpush.bf16.msra.mxu0 0
        %867 = vmatpush.bf16.msra.mxu0 %v858
        %868 = vmatmul.bf16.gmra.mxu0 %v854
        %v869 = vpop.f32.mrf.mxu0
        %v870 = vadd.f32 0.0, %v869
        %v871 = vpop.f32.mrf.mxu0
        %872 = vdwg.mxu0
        %v873 = vpack.c.bf16 %v870, %v870
        %875 = vrot.lane.b32.xlu0 %v814, 120
        %v876 = vpop.permute.xlu0 %875
        %877 = vrot.lane.b32.xlu0 %v815, 88
        %v878 = vpop.permute.xlu0 %877
        %v880 = vsel %vm819, %v876, 0
        %v883 = vsel %vm819, %v878, 0
        %885 = vmatpush.bf16.xpose.msra.mxu0 0
        %886 = vmatpush.bf16.xpose.msra.mxu0 0
        %887 = vmatpush.bf16.xpose.msra.mxu0 0
        %888 = vmatpush.bf16.xpose.msra.mxu0 0
        %889 = vmatpush.bf16.xpose.msra.mxu0 0
        %890 = vmatpush.bf16.xpose.msra.mxu0 0
        %891 = vmatpush.bf16.xpose.msra.mxu0 0
        %892 = vmatpush.bf16.xpose.msra.mxu0 %v883
        %893 = vmatmul.bf16.gmra.mxu0 %v880
        %v894 = vpop.f32.mrf.mxu0
        %v895 = vadd.f32 0.0, %v894
        %v896 = vpop.f32.mrf.mxu0
        %897 = vdwg.mxu0
        %v898 = vsel %vm819, %v895, -inf
        %899 = vmax.xlane.f32.xlu0 %v898
        %v900 = vpop.xlane.xlu0 %899
        %v901 = vsub.f32 %v895, %v900
        %v902 = vmul.f32 %v901, 1.442695
        %v903 = vpow.pop %v902
        %v904 = vsel %vm819, %v903, 0.0
        %905 = vadd.xlane.f32.xlu0 %v904
        %v906 = vpop.xlane.xlu0 %905
        %v907 = vrcp.pop %v906
        %v908 = vmul.f32 %v903, %v907
        %v909 = vpack.c.bf16 %v908, %v908
        %910 = vrot.lane.b32.xlu0 %v815, 56
        %v911 = vpop.permute.xlu0 %910
        %v913 = vsel %vm819, %v909, 0
        %v916 = vsel %vm856, %v911, 0
        %918 = vmatpush.bf16.msra.mxu0 0
        %919 = vmatpush.bf16.msra.mxu0 0
        %920 = vmatpush.bf16.msra.mxu0 0
        %921 = vmatpush.bf16.msra.mxu0 0
        %922 = vmatpush.bf16.msra.mxu0 0
        %923 = vmatpush.bf16.msra.mxu0 0
        %924 = vmatpush.bf16.msra.mxu0 0
        %925 = vmatpush.bf16.msra.mxu0 %v916
        %926 = vmatmul.bf16.gmra.mxu0 %v913
        %v927 = vpop.f32.mrf.mxu0
        %v928 = vadd.f32 0.0, %v927
        %v929 = vpop.f32.mrf.mxu0
        %930 = vdwg.mxu0
        %v931 = vpack.c.bf16 %v928, %v928
        %v933 = vsel %vm819, %v931, 0
        %v936 = vsel %vm856, %v810, 0
        %938 = vmatpush.bf16.msra.mxu0 0
        %939 = vmatpush.bf16.msra.mxu0 0
        %940 = vmatpush.bf16.msra.mxu0 0
        %941 = vmatpush.bf16.msra.mxu0 0
        %942 = vmatpush.bf16.msra.mxu0 0
        %943 = vmatpush.bf16.msra.mxu0 0
        %944 = vmatpush.bf16.msra.mxu0 0
        %945 = vmatpush.bf16.msra.mxu0 %v936
        %946 = vmatmul.bf16.gmra.mxu0 %v933
        %v947 = vpop.f32.mrf.mxu0
        %v948 = vadd.f32 0.0, %v947
        %v949 = vpop.f32.mrf.mxu0
        %950 = vdwg.mxu0
        %v952 = vsel %vm819, %v873, 0
        %v955 = vsel %vm856, %v809, 0
        %957 = vmatpush.bf16.msra.mxu0 0
        %958 = vmatpush.bf16.msra.mxu0 0
        %959 = vmatpush.bf16.msra.mxu0 0
        %960 = vmatpush.bf16.msra.mxu0 0
        %961 = vmatpush.bf16.msra.mxu0 0
        %962 = vmatpush.bf16.msra.mxu0 0
        %963 = vmatpush.bf16.msra.mxu0 0
        %964 = vmatpush.bf16.msra.mxu0 %v955
        %965 = vmatmul.bf16.gmra.mxu0 %v952
        %v966 = vpop.f32.mrf.mxu0
        %v967 = vadd.f32 %v948, %v966
        %v968 = vpop.f32.mrf.mxu0
        %969 = vdwg.mxu0
        %970 = vrot.lane.b32.xlu0 %v814, 112
        %v971 = vpop.permute.xlu0 %970
        %972 = vrot.lane.b32.xlu0 %v815, 80
        %v973 = vpop.permute.xlu0 %972
        %v975 = vsel %vm819, %v971, 0
        %v978 = vsel %vm819, %v973, 0
        %980 = vmatpush.bf16.xpose.msra.mxu0 0
        %981 = vmatpush.bf16.xpose.msra.mxu0 0
        %982 = vmatpush.bf16.xpose.msra.mxu0 0
        %983 = vmatpush.bf16.xpose.msra.mxu0 0
        %984 = vmatpush.bf16.xpose.msra.mxu0 0
        %985 = vmatpush.bf16.xpose.msra.mxu0 0
        %986 = vmatpush.bf16.xpose.msra.mxu0 0
        %987 = vmatpush.bf16.xpose.msra.mxu0 %v978
        %988 = vmatmul.bf16.gmra.mxu0 %v975
        %v989 = vpop.f32.mrf.mxu0
        %v990 = vadd.f32 0.0, %v989
        %v991 = vpop.f32.mrf.mxu0
        %992 = vdwg.mxu0
        %v993 = vsel %vm819, %v990, -inf
        %994 = vmax.xlane.f32.xlu0 %v993
        %v995 = vpop.xlane.xlu0 %994
        %v996 = vsub.f32 %v990, %v995
        %v997 = vmul.f32 %v996, 1.442695
        %v998 = vpow.pop %v997
        %v999 = vsel %vm819, %v998, 0.0
        %1000 = vadd.xlane.f32.xlu0 %v999
        %v1001 = vpop.xlane.xlu0 %1000
        %v1002 = vrcp.pop %v1001
        %v1003 = vmul.f32 %v998, %v1002
        %v1004 = vpack.c.bf16 %v1003, %v1003
        %1005 = vrot.lane.b32.xlu0 %v815, 48
        %v1006 = vpop.permute.xlu0 %1005
        %v1008 = vsel %vm819, %v1004, 0
        %v1011 = vsel %vm856, %v1006, 0
        %1013 = vmatpush.bf16.msra.mxu0 0
        %1014 = vmatpush.bf16.msra.mxu0 0
        %1015 = vmatpush.bf16.msra.mxu0 0
        %1016 = vmatpush.bf16.msra.mxu0 0
        %1017 = vmatpush.bf16.msra.mxu0 0
        %1018 = vmatpush.bf16.msra.mxu0 0
        %1019 = vmatpush.bf16.msra.mxu0 0
        %1020 = vmatpush.bf16.msra.mxu0 %v1011
        %1021 = vmatmul.bf16.gmra.mxu0 %v1008
        %v1022 = vpop.f32.mrf.mxu0
        %v1023 = vadd.f32 0.0, %v1022
        %v1024 = vpop.f32.mrf.mxu0
        %1025 = vdwg.mxu0
        %v1026 = vpack.c.bf16 %v1023, %v1023
        %v1028 = vsel %vm819, %v1026, 0
        %v1031 = vsel %vm856, %v811, 0
        %1033 = vmatpush.bf16.msra.mxu0 0
        %1034 = vmatpush.bf16.msra.mxu0 0
        %1035 = vmatpush.bf16.msra.mxu0 0
        %1036 = vmatpush.bf16.msra.mxu0 0
        %1037 = vmatpush.bf16.msra.mxu0 0
        %1038 = vmatpush.bf16.msra.mxu0 0
        %1039 = vmatpush.bf16.msra.mxu0 0
        %1040 = vmatpush.bf16.msra.mxu0 %v1031
        %1041 = vmatmul.bf16.gmra.mxu0 %v1028
        %v1042 = vpop.f32.mrf.mxu0
        %v1043 = vadd.f32 0.0, %v1042
        %v1044 = vpop.f32.mrf.mxu0
        %1045 = vdwg.mxu0
        %v1046 = vadd.f32 %v967, %v1043
        %1047 = vrot.lane.b32.xlu0 %v814, 104
        %v1048 = vpop.permute.xlu0 %1047
        %1049 = vrot.lane.b32.xlu0 %v815, 72
        %v1050 = vpop.permute.xlu0 %1049
        %v1052 = vsel %vm819, %v1048, 0
        %v1055 = vsel %vm819, %v1050, 0
        %1057 = vmatpush.bf16.xpose.msra.mxu0 0
        %1058 = vmatpush.bf16.xpose.msra.mxu0 0
        %1059 = vmatpush.bf16.xpose.msra.mxu0 0
        %1060 = vmatpush.bf16.xpose.msra.mxu0 0
        %1061 = vmatpush.bf16.xpose.msra.mxu0 0
        %1062 = vmatpush.bf16.xpose.msra.mxu0 0
        %1063 = vmatpush.bf16.xpose.msra.mxu0 0
        %1064 = vmatpush.bf16.xpose.msra.mxu0 %v1055
        %1065 = vmatmul.bf16.gmra.mxu0 %v1052
        %v1066 = vpop.f32.mrf.mxu0
        %v1067 = vadd.f32 0.0, %v1066
        %v1068 = vpop.f32.mrf.mxu0
        %1069 = vdwg.mxu0
        %v1070 = vsel %vm819, %v1067, -inf
        %1071 = vmax.xlane.f32.xlu0 %v1070
        %v1072 = vpop.xlane.xlu0 %1071
        %v1073 = vsub.f32 %v1067, %v1072
        %v1074 = vmul.f32 %v1073, 1.442695
        %v1075 = vpow.pop %v1074
        %v1076 = vsel %vm819, %v1075, 0.0
        %1077 = vadd.xlane.f32.xlu0 %v1076
        %v1078 = vpop.xlane.xlu0 %1077
        %v1079 = vrcp.pop %v1078
        %v1080 = vmul.f32 %v1075, %v1079
        %v1081 = vpack.c.bf16 %v1080, %v1080
        %1082 = vrot.lane.b32.xlu0 %v815, 40
        %v1083 = vpop.permute.xlu0 %1082
        %v1085 = vsel %vm819, %v1081, 0
        %v1088 = vsel %vm856, %v1083, 0
        %1090 = vmatpush.bf16.msra.mxu0 0
        %1091 = vmatpush.bf16.msra.mxu0 0
        %1092 = vmatpush.bf16.msra.mxu0 0
        %1093 = vmatpush.bf16.msra.mxu0 0
        %1094 = vmatpush.bf16.msra.mxu0 0
        %1095 = vmatpush.bf16.msra.mxu0 0
        %1096 = vmatpush.bf16.msra.mxu0 0
        %1097 = vmatpush.bf16.msra.mxu0 %v1088
        %1098 = vmatmul.bf16.gmra.mxu0 %v1085
        %v1099 = vpop.f32.mrf.mxu0
        %v1100 = vadd.f32 0.0, %v1099
        %v1101 = vpop.f32.mrf.mxu0
        %1102 = vdwg.mxu0
        %v1103 = vpack.c.bf16 %v1100, %v1100
        %v1105 = vsel %vm819, %v1103, 0
        %v1108 = vsel %vm856, %v812, 0
        %1110 = vmatpush.bf16.msra.mxu0 0
        %1111 = vmatpush.bf16.msra.mxu0 0
        %1112 = vmatpush.bf16.msra.mxu0 0
        %1113 = vmatpush.bf16.msra.mxu0 0
        %1114 = vmatpush.bf16.msra.mxu0 0
        %1115 = vmatpush.bf16.msra.mxu0 0
        %1116 = vmatpush.bf16.msra.mxu0 0
        %1117 = vmatpush.bf16.msra.mxu0 %v1108
        %1118 = vmatmul.bf16.gmra.mxu0 %v1105
        %v1119 = vpop.f32.mrf.mxu0
        %v1120 = vadd.f32 0.0, %v1119
        %v1121 = vpop.f32.mrf.mxu0
        %1122 = vdwg.mxu0
        %v1123 = vadd.f32 %v1046, %v1120
        %v1124 = vld [vmem:[%s692] sm:$0x1]
        %v1126 = vperm.slane %v1124, 0
        %v1128 = vadd.f32 %v1123, %v1126
        %v1129 = vadd.f32 %v1128, %v770
        %v1130 = vld [vmem:[%s695] sm:$0x1]
        %v1131 = vld [vmem:[%s698] sm:$0x1]
        %v1132 = vsel %vm792, %v1129, 0.0
        %1133 = vadd.xlane.f32.xlu0 %v1132
        %v1134 = vpop.xlane.xlu0 %1133
        %v1135 = vrcp.pop 32.0
        %v1136 = vmul.f32 32.0, %v1135
        %v1137 = vsub.f32 1.0, %v1136
        %v1138 = vmul.f32 %v1135, %v1137
        %v1139 = vadd.f32 %v1135, %v1138
        %vm1140 = vweird.f32 %v1135
        %v1141 = vsel %vm1140, %v1135, %v1139
        %v1142 = vmul.f32 %v1134, %v1141
        %v1143 = vsub.f32 %v1129, %v1142
        %v1144 = vmul.f32 %v1143, %v1143
        %v1145 = vsel %vm792, %v1144, 0.0
        %1146 = vadd.xlane.f32.xlu0 %v1145
        %v1147 = vpop.xlane.xlu0 %1146
        %v1148 = vmul.f32 %v1147, %v1141
        %v1149 = vadd.f32 %v1148, 1e-12
        %v1150 = vrsqrt.pop %v1149
        %v1151 = vmul.f32 %v1150, %v1149
        %v1152 = vmul.f32 %v1151, %v1150
        %v1153 = vmul.f32 0.5, %v1152
        %v1154 = vsub.f32 1.5, %v1153
        %v1155 = vmul.f32 %v1150, %v1154
        %vm1156 = vweird.f32 %v1149
        %vm1157 = vweird.f32 %v1150
        %vm1158 = vmor %vm1156, %vm1157
        %v1159 = vsel %vm1158, %v1150, %v1155
        %v1160 = vmul.f32 %v1143, %v1159
        %v1162 = vperm.slane %v1130, 0
        %v1164 = vmul.f32 %v1160, %v1162
        %v1166 = vperm.slane %v1131, 0
        %v1168 = vadd.f32 %v1164, %v1166
        %v1169 = vld [vmem:[%s703] sm:$0xf]
        %v1170 = vld [vmem:[%s703 + $0x4] sm:$0xf]
        %v1171 = vld [vmem:[%s703 + $0x8] sm:$0xf]
        %v1172 = vld [vmem:[%s703 + $0xc] sm:$0xf]
        %v1173 = vld [vmem:[%s706] sm:$0x1]
        %v1174 = vpack.c.bf16 %v1168, %v1168
        %v1176 = vperm.slane %v1173, 0
        %v1182 = vunpack.c.l.b16 %v1169
        %v1183 = vunpack.c.l.b16 %v1170
        %v1184 = vunpack.c.l.b16 %v1171
        %v1185 = vunpack.c.l.b16 %v1172
        %v1186 = vpack.c.b16 %v1183, %v1182
        %v1187 = vpack.c.b16 %v1185, %v1184
        %v1191 = vsel %vm792, %v1174, 0
        %1193 = vmatpush.bf16.msra.mxu0 0
        %1194 = vmatpush.bf16.msra.mxu0 0
        %1195 = vmatpush.bf16.msra.mxu0 0
        %1196 = vmatpush.bf16.msra.mxu0 0
        %1197 = vmatpush.bf16.msra.mxu0 0
        %1198 = vmatpush.bf16.msra.mxu0 0
        %1199 = vmatpush.bf16.msra.mxu0 %v1187
        %1200 = vmatpush.bf16.msra.mxu0 %v1186
        %1201 = vmatmul.bf16.gmra.mxu0 %v1191
        %v1202 = vpop.f32.mrf.mxu0
        %v1203 = vadd.f32 %v1176, %v1202
        %v1204 = vpop.f32.mrf.mxu0
        %1205 = vdwg.mxu0
        %v1206 = vmul.f32 %v1203, 0.5
        %v1207 = vmul.f32 %v1203, 0.70710677
        %v1208 = vand.u32 2147483647, %v1207
        %v1209 = vmul.f32 %v1208, 0.3275911
        %v1210 = vadd.f32 %v1209, 1.0
        %v1211 = vrcp.pop %v1210
        %v1212 = vmul.f32 %v1210, %v1211
        %v1213 = vsub.f32 1.0, %v1212
        %v1214 = vmul.f32 %v1211, %v1213
        %v1215 = vadd.f32 %v1211, %v1214
        %vm1216 = vweird.f32 %v1210
        %vm1217 = vweird.f32 %v1211
        %vm1218 = vmor %vm1216, %vm1217
        %v1219 = vsel %vm1218, %v1211, %v1215
        %v1220 = vand.u32 2147483647, %v1210
        %vm1221 = vcmp.eq.f32.partialorder %v1220, 8.507059e+37
        %v1222 = vand.u32 %v1210, 2147483648
        %v1223 = vor.u32 1.1754944e-38, %v1222
        %v1224 = vsel %vm1221, %v1223, %v1219
        %v1225 = vmul.f32 1.0, %v1224
        %v1226 = vmul.f32 %v1225, 1.0614054
        %v1227 = vadd.f32 %v1226, -1.4531521
        %v1228 = vmul.f32 %v1227, %v1225
        %v1229 = vadd.f32 %v1228, 1.4214138
        %v1230 = vmul.f32 %v1229, %v1225
        %v1231 = vadd.f32 %v1230, -0.28449672
        %v1232 = vmul.f32 %v1231, %v1225
        %v1233 = vadd.f32 %v1232, 0.2548296
        %v1234 = vmul.f32 %v1233, %v1225
        %v1235 = vsub.f32 0.0, %v1208
        %v1236 = vmul.f32 %v1235, %v1208
        %v1237 = vmul.f32 %v1236, 1.442695
        %v1238 = vpow.pop %v1237
        %v1239 = vmul.f32 %v1234, %v1238
        %v1240 = vsub.f32 1.0, %v1239
        %vm1241 = vcmp.ge.f32.partialorder %v1207, 0.0
        %v1242 = vsub.f32 0.0, %v1240
        %v1243 = vsel %vm1241, %v1240, %v1242
        %v1244 = vadd.f32 %v1243, 1.0
        %v1245 = vmul.f32 %v1206, %v1244
        %v1246 = vld [vmem:[%s711] sm:$0xf]
        %v1247 = vld [vmem:[%s711 + $0x4] sm:$0xf]
        %v1248 = vld [vmem:[%s711 + $0x8] sm:$0xf]
        %v1249 = vld [vmem:[%s711 + $0xc] sm:$0xf]
        %v1250 = vld [vmem:[%s711 + $0x10] sm:$0xf]
        %v1251 = vld [vmem:[%s711 + $0x14] sm:$0xf]
        %v1252 = vld [vmem:[%s711 + $0x18] sm:$0xf]
        %v1253 = vld [vmem:[%s711 + $0x1c] sm:$0xf]
        %v1254 = vld [vmem:[%s714] sm:$0x1]
        %v1255 = vpack.c.bf16 %v1245, %v1245
        %v1257 = vperm.slane %v1254, 0
        %v1267 = vunpack.c.l.b16 %v1246
        %v1268 = vunpack.c.l.b16 %v1247
        %v1269 = vunpack.c.l.b16 %v1248
        %v1270 = vunpack.c.l.b16 %v1249
        %v1271 = vunpack.c.l.b16 %v1250
        %v1272 = vunpack.c.l.b16 %v1251
        %v1273 = vunpack.c.l.b16 %v1252
        %v1274 = vunpack.c.l.b16 %v1253
        %v1275 = vpack.c.b16 %v1268, %v1267
        %v1276 = vpack.c.b16 %v1270, %v1269
        %v1277 = vpack.c.b16 %v1272, %v1271
        %v1278 = vpack.c.b16 %v1274, %v1273
        %vm1283 = vcmask 523264
        %v1285 = vsel %vm1283, %v1255, 0
        %1287 = vmatpush.bf16.msra.mxu0 0
        %1288 = vmatpush.bf16.msra.mxu0 0
        %1289 = vmatpush.bf16.msra.mxu0 0
        %1290 = vmatpush.bf16.msra.mxu0 0
        %1291 = vmatpush.bf16.msra.mxu0 %v1278
        %1292 = vmatpush.bf16.msra.mxu0 %v1277
        %1293 = vmatpush.bf16.msra.mxu0 %v1276
        %1294 = vmatpush.bf16.msra.mxu0 %v1275
        %1295 = vmatmul.bf16.gmra.mxu0 %v1285
        %v1296 = vpop.f32.mrf.mxu0
        %v1297 = vadd.f32 %v1257, %v1296
        %v1298 = vpop.f32.mrf.mxu0
        %1299 = vdwg.mxu0
        %v1300 = vadd.f32 %v1297, %v1168
        %v1301 = vld [vmem:[%s717] sm:$0x1]
        %v1302 = vld [vmem:[%s720] sm:$0x1]
        %v1303 = vsel %vm792, %v1300, 0.0
        %1304 = vadd.xlane.f32.xlu0 %v1303
        %v1305 = vpop.xlane.xlu0 %1304
        %v1306 = vmul.f32 %v1305, %v1141
        %v1307 = vsub.f32 %v1300, %v1306
        %v1308 = vmul.f32 %v1307, %v1307
        %v1309 = vsel %vm792, %v1308, 0.0
        %1310 = vadd.xlane.f32.xlu0 %v1309
        %v1311 = vpop.xlane.xlu0 %1310
        %v1312 = vmul.f32 %v1311, %v1141
        %v1313 = vadd.f32 %v1312, 1e-12
        %v1314 = vrsqrt.pop %v1313
        %v1315 = vmul.f32 %v1314, %v1313
        %v1316 = vmul.f32 %v1315, %v1314
        %v1317 = vmul.f32 0.5, %v1316
        %v1318 = vsub.f32 1.5, %v1317
        %v1319 = vmul.f32 %v1314, %v1318
        %vm1320 = vweird.f32 %v1313
        %vm1321 = vweird.f32 %v1314
        %vm1322 = vmor %vm1320, %vm1321
        %v1323 = vsel %vm1322, %v1314, %v1319
        %v1324 = vmul.f32 %v1307, %v1323
        %v1326 = vperm.slane %v1301, 0
        %v1328 = vmul.f32 %v1324, %v1326
        %v1330 = vperm.slane %v1302, 0
        %v1332 = vadd.f32 %v1328, %v1330
        %1333 = vst.msk [vmem:[%s672] sm:$0xff] %vm792, %v1332
        %s1334 = sand.u32 %s451, 1
        %s1335 = scalar_lea.sflag [#allocation3], %s1334
        %s1336 = sand.u32 %s451, 1
        %s1337 = smul.addr %s1336, 8
        %s1338 = scalar_lea.vmem [#allocation2], %s1337
        // Predicated region
        $region89: #{distilbert_forward.1} parent=83 // pred_check
          %p1339 = pneg %p461
        $region90: #{distilbert_forward.1} parent=83 // pred_check_branch
          %1341 = sbr.rel (%p1339) target = $region92
        $region91: #{distilbert_forward.1} parent=83 // pred_region
          %1343 = vsyncadd %s1335, 0
          %s1344 = smul.addr %s34, 8
          %s1345 = scalar_lea.hbm %s16, %s1344
          %s1347 = sshll.u32 %s1338, 4
          %s1348 = int_to_ptr.vmem [resolvable:$true] %s1347
          %s1349 = sshll.u32 %s1345, 4
          %s1350 = int_to_ptr.hbm [resolvable:$true] %s1349
          %1352 = dma.vmem_to_hbm [thread:$0]  %s1348, 128, %s1350, %s1335
        $region92: #{distilbert_forward.1} parent=83 // pred_fallthru
          _
      $region84: #{distilbert_forward.1} parent=5 // pred_fallthru
        _
      %p1353 = scmp.le.s32.totalorder 2, %s25
      // Predicated region
      $region93: #{distilbert_forward.1} parent=5 // pred_check
        %p1354 = pneg %p1353
      $region94: #{distilbert_forward.1} parent=5 // pred_check_branch
        %1356 = sbr.rel (%p1354) target = $region96
      $region95: #{distilbert_forward.1} parent=5 // pred_region
        %s1357 = ssub.s32 %s25, 2
        // Predicated region
        $region97: #{distilbert_forward.1} parent=95 // pred_check
          %p1358 = pneg %p467
        $region98: #{distilbert_forward.1} parent=95 // pred_check_branch
          %1360 = sbr.rel (%p1358) target = $region100
        $region99: #{distilbert_forward.1} parent=95 // pred_region
          %s1361 = sand.u32 %s452, 1
          %s1362 = scalar_lea.sflag [#allocation3], %s1361
          %s1363 = sand.u32 %s452, 1
          %s1364 = smul.addr %s1363, 8
          %s1365 = scalar_lea.vmem [#allocation2], %s1364
          %1367 = dma.done %s1362, 128
        $region100: #{distilbert_forward.1} parent=95 // pred_fallthru
          _
      $region96: #{distilbert_forward.1} parent=5 // pred_fallthru
        _
    $region6: #{distilbert_forward.1} parent=1 // loop_footer
      %s29 = sadd.s32 1, %s25
    $region7: #{distilbert_forward.1} parent=1 // loop_footer_branch
      %24 = sbr.rel target = $region3
    $region8: #{distilbert_forward.1} parent=1 // loop_exit
      _
    %1368 = vsyncpa [#allocation3], 1
    %s1369 = scalar_lea.sflag [#allocation3], 1
    %1370 = vsyncpa %s1369, 1

</llo_original>
